<compile_context>
chip_gen: v5e
topology: v5e:2x2
jax: 0.10.0
libtpu: 0.0.40
codegen_flags: <defaults>
</compile_context>

<pallas_src>
import jax
import jax.numpy as jnp
from jax import lax
from jax.experimental import pallas as pl
from jax.experimental.pallas import tpu as pltpu


def _round_up(x, m):
    return (x + m - 1) // m * m


def tracegen_kernel(embeds_ref,     # (T, B_BLK, E)  gathered embeddings, time-major
                    w_ih0_ref,      # (E, 4H)
                    w_hh0_ref,      # (H, 4H)
                    b0_ref,         # (1, 4H) = b_ih0 + b_hh0
                    w1_ref,         # (2H, 4H) = [w_ih1 ; w_hh1] stacked on rows
                    b1_ref,         # (1, 4H) = b_ih1 + b_hh1
                    w_out_ref,      # (H, Vp)  lane-padded output weights
                    b_out_ref,      # (1, Vp)
                    out_ref,        # (B_BLK, Vp)
                    xg_ref):        # scratch VMEM (T, B_BLK, 4H)
    T, B, E = embeds_ref.shape
    H = w_hh0_ref.shape[0]

    # ---- precompute layer-0 input projections for every timestep (one MXU matmul) ----
    x2d = embeds_ref[...].reshape(T * B, E)
    xg0 = jnp.dot(x2d, w_ih0_ref[...],
                  preferred_element_type=jnp.float32) + b0_ref[...]      # (T*B, 4H)
    xg_ref[...] = xg0.reshape(T, B, 4 * H)

    # ---- hoist loop-invariant loads / broadcasts out of the recurrence ----
    w_hh0 = w_hh0_ref[...]
    w1 = w1_ref[...]
    b1 = b1_ref[...]

    def cell(gates, c_prev):
        # Activate the whole (B, 4H) vreg once per unit, then slice (PyTorch order i,f,g,o).
        sig = jax.nn.sigmoid(gates)
        th = jnp.tanh(gates)
        i = sig[:, 0 * H:1 * H]
        f = sig[:, 1 * H:2 * H]
        g = th[:, 2 * H:3 * H]
        o = sig[:, 3 * H:4 * H]
        c = f * c_prev + i * g
        h = o * jnp.tanh(c)
        return h, c

    zeros = jnp.zeros((B, H), jnp.float32)

    def step(t, carry):
        h0, c0, h1, c1 = carry
        # layer 0: recurrent projection only (input part precomputed)
        g0 = xg_ref[t] + jnp.dot(h0, w_hh0, preferred_element_type=jnp.float32)
        h0n, c0n = cell(g0, c0)
        # layer 1: fused input+recurrent matmul (eval-mode: no inter-layer dropout)
        hcat = jnp.concatenate([h0n, h1], axis=-1)                        # (B, 2H)
        g1 = jnp.dot(hcat, w1, preferred_element_type=jnp.float32) + b1
        h1n, c1n = cell(g1, c1)
        return h0n, c0n, h1n, c1n

    h0, c0, h1, c1 = lax.fori_loop(0, T, step, (zeros, zeros, zeros, zeros),
                                   unroll=True)

    # ---- dense2 on the last timestep of the top layer (lane-dense store) ----
    out_ref[...] = (jnp.dot(h1, w_out_ref[...], preferred_element_type=jnp.float32)
                    + b_out_ref[...])


def tracegen_forward(ids, emb,
                     w_ih0, w_hh0, b_ih0, b_hh0,
                     w_ih1, w_hh1, b_ih1, b_hh1,
                     w_out, b_out,
                     *, b_blk=8):
    """ids: (B, T) int token ids.  Weights in PyTorch layout ((4H,in), (4H,), (V,H), (V,))."""
    B, T = ids.shape
    V, E = emb.shape
    H = w_hh0.shape[1]

    Bp = _round_up(max(B, b_blk), b_blk)     # sublane-aligned batch, grid of b_blk blocks
    Vp = _round_up(V, 128)                   # lane-dense output slab

    # ---- glue (layout plumbing only): gather, pad, pre-transpose ----
    ids_p = jnp.zeros((Bp, T), jnp.int32).at[:B].set(ids.astype(jnp.int32))
    embeds = emb[ids_p].astype(jnp.float32)                  # (Bp, T, E) gather in XLA
    embeds_tm = jnp.transpose(embeds, (1, 0, 2))             # (T, Bp, E) time-major

    w_ih0_t = w_ih0.T.astype(jnp.float32)                    # (E, 4H)
    w_hh0_t = w_hh0.T.astype(jnp.float32)                    # (H, 4H)
    b0 = (b_ih0 + b_hh0).reshape(1, 4 * H).astype(jnp.float32)
    w1 = jnp.concatenate([w_ih1.T, w_hh1.T], axis=0).astype(jnp.float32)   # (2H, 4H)
    b1 = (b_ih1 + b_hh1).reshape(1, 4 * H).astype(jnp.float32)
    w_out_p = jnp.zeros((H, Vp), jnp.float32).at[:, :V].set(w_out.T.astype(jnp.float32))
    b_out_p = jnp.zeros((1, Vp), jnp.float32).at[:, :V].set(
        b_out.reshape(1, V).astype(jnp.float32))

    n_blk = Bp // b_blk
    bcast = lambda i: (0, 0)

    grid_spec = pltpu.PrefetchScalarGridSpec(
        num_scalar_prefetch=0,
        grid=(n_blk,),
        in_specs=[
            pl.BlockSpec((T, b_blk, E), lambda i: (0, i, 0)),   # embeds: block over batch
            pl.BlockSpec((E, 4 * H), bcast),
            pl.BlockSpec((H, 4 * H), bcast),
            pl.BlockSpec((1, 4 * H), bcast),
            pl.BlockSpec((2 * H, 4 * H), bcast),
            pl.BlockSpec((1, 4 * H), bcast),
            pl.BlockSpec((H, Vp), bcast),
            pl.BlockSpec((1, Vp), bcast),
        ],
        out_specs=pl.BlockSpec((b_blk, Vp), lambda i: (i, 0)),
        scratch_shapes=[pltpu.VMEM((T, b_blk, 4 * H), jnp.float32)],
    )

    out_p = pl.pallas_call(
        tracegen_kernel,
        out_shape=jax.ShapeDtypeStruct((Bp, Vp), jnp.float32),
        grid_spec=grid_spec,
        compiler_params=pltpu.CompilerParams(
            # batch blocks are independent -> shard across v7x's 2 TensorCores
            dimension_semantics=("parallel",)),
    )(embeds_tm, w_ih0_t, w_hh0_t, b0, w1, b1, w_out_p, b_out_p)

    return out_p[:B, :V]


def tracegen_ref(ids, emb,
                 w_ih0, w_hh0, b_ih0, b_hh0,
                 w_ih1, w_hh1, b_ih1, b_hh1,
                 w_out, b_out):
    """Pure-JAX reference matching torch.nn.LSTM eval-mode semantics."""
    x = emb[ids]                                     # (B, T, E)
    B, T, _ = x.shape
    H = w_hh0.shape[1]

    def run_layer(x, w_ih, w_hh, b_ih, b_hh):
        h = jnp.zeros((B, H), jnp.float32)
        c = jnp.zeros((B, H), jnp.float32)
        outs = []
        for t in range(T):
            g = x[:, t] @ w_ih.T + b_ih + h @ w_hh.T + b_hh
            i = jax.nn.sigmoid(g[:, :H])
            f = jax.nn.sigmoid(g[:, H:2 * H])
            gg = jnp.tanh(g[:, 2 * H:3 * H])
            o = jax.nn.sigmoid(g[:, 3 * H:])
            c = f * c + i * gg
            h = o * jnp.tanh(c)
            outs.append(h)
        return jnp.stack(outs, axis=1)

    y0 = run_layer(x, w_ih0, w_hh0, b_ih0, b_hh0)
    y1 = run_layer(y0, w_ih1, w_hh1, b_ih1, b_hh1)
    return y1[:, -1] @ w_out.T + b_out


if __name__ == "__main__":
    # Small shapes consistent with the module (vocab, embed_dim, hidden_dim, B, T)
    V, E, H = 64, 32, 32
    B, T = 4, 8

    key = jax.random.PRNGKey(0)
    keys = jax.random.split(key, 12)

    def u(k, shape, bound):
        return jax.random.uniform(k, shape, jnp.float32, -bound, bound)

    kH = 1.0 / float(jnp.sqrt(jnp.float32(H)))
    emb = jax.random.normal(keys[0], (V, E), jnp.float32)      # nn.Embedding ~ N(0,1)
    w_ih0 = u(keys[1], (4 * H, E), kH)
    w_hh0 = u(keys[2], (4 * H, H), kH)
    b_ih0 = u(keys[3], (4 * H,), kH)
    b_hh0 = u(keys[4], (4 * H,), kH)
    w_ih1 = u(keys[5], (4 * H, H), kH)
    w_hh1 = u(keys[6], (4 * H, H), kH)
    b_ih1 = u(keys[7], (4 * H,), kH)
    b_hh1 = u(keys[8], (4 * H,), kH)
    w_out = u(keys[9], (V, H), kH)                              # nn.Linear(H, V)
    b_out = u(keys[10], (V,), kH)
    ids = jax.random.randint(keys[11], (B, T), 0, V, jnp.int32)

    out = tracegen_forward(ids, emb,
                           w_ih0, w_hh0, b_ih0, b_hh0,
                           w_ih1, w_hh1, b_ih1, b_hh1,
                           w_out, b_out)
    out = jax.block_until_ready(out)

    ref = tracegen_ref(ids, emb,
                       w_ih0, w_hh0, b_ih0, b_hh0,
                       w_ih1, w_hh1, b_ih1, b_hh1,
                       w_out, b_out)
    assert out.shape == (B, V)
    assert jnp.allclose(out, ref, atol=1e-4, rtol=1e-4), "mismatch vs pure-JAX reference"
    print("KERNEL_OK")
</pallas_src>

<mosaic_0001>
module attributes {stable_mosaic.version = 11 : i64} {
  func.func @tracegen_kernel(%arg0: i32, %arg1: memref<8x8x32xf32, #tpu.memory_space<vmem>>, %arg2: memref<32x128xf32, #tpu.memory_space<vmem>>, %arg3: memref<32x128xf32, #tpu.memory_space<vmem>>, %arg4: memref<1x128xf32, #tpu.memory_space<vmem>>, %arg5: memref<64x128xf32, #tpu.memory_space<vmem>>, %arg6: memref<1x128xf32, #tpu.memory_space<vmem>>, %arg7: memref<32x128xf32, #tpu.memory_space<vmem>>, %arg8: memref<1x128xf32, #tpu.memory_space<vmem>>, %arg9: memref<8x128xf32, #tpu.memory_space<vmem>>, %arg10: memref<8x8x128xf32, #tpu.memory_space<vmem>>) attributes {dimension_semantics = [#tpu.dimension_semantics<parallel>], iteration_bounds = array<i64: 1>, scalar_prefetch = 0 : i64, scratch_operands = 1 : i64, tpu.core_type = #tpu.core_type<tc>, window_params = [{transform_indices = @transform_0, window_bounds = array<i64: 8, 8, 32>}, {pipeline_mode = #tpu.pipeline_mode<synchronous>, transform_indices = @transform_1, window_bounds = array<i64: 32, 128>}, {pipeline_mode = #tpu.pipeline_mode<synchronous>, transform_indices = @transform_2, window_bounds = array<i64: 32, 128>}, {pipeline_mode = #tpu.pipeline_mode<synchronous>, transform_indices = @transform_3, window_bounds = array<i64: 1, 128>}, {pipeline_mode = #tpu.pipeline_mode<synchronous>, transform_indices = @transform_4, window_bounds = array<i64: 64, 128>}, {pipeline_mode = #tpu.pipeline_mode<synchronous>, transform_indices = @transform_5, window_bounds = array<i64: 1, 128>}, {pipeline_mode = #tpu.pipeline_mode<synchronous>, transform_indices = @transform_6, window_bounds = array<i64: 32, 128>}, {pipeline_mode = #tpu.pipeline_mode<synchronous>, transform_indices = @transform_7, window_bounds = array<i64: 1, 128>}, {transform_indices = @transform_8, window_bounds = array<i64: 8, 128>}]} {
    %c0 = arith.constant 0 : index
    %c0_0 = arith.constant 0 : index
    %c0_1 = arith.constant 0 : index
    %0 = vector.load %arg1[%c0, %c0_0, %c0_1] : memref<8x8x32xf32, #tpu.memory_space<vmem>>, vector<8x8x32xf32>
    %1 = vector.shape_cast %0 : vector<8x8x32xf32> to vector<64x32xf32>
    %c0_2 = arith.constant 0 : index
    %c0_3 = arith.constant 0 : index
    %2 = vector.load %arg2[%c0_2, %c0_3] : memref<32x128xf32, #tpu.memory_space<vmem>>, vector<32x128xf32>
    %cst = arith.constant dense<0.000000e+00> : vector<64x128xf32>
    %3 = tpu.matmul %1, %2, %cst {dimension_numbers = #tpu.dot_dimension_numbers<[1], [0], [0], [1], [0, 0, 1, 1], [], []>} : vector<64x32xf32>, vector<32x128xf32>, vector<64x128xf32> -> vector<64x128xf32>
    %c0_4 = arith.constant 0 : index
    %c0_5 = arith.constant 0 : index
    %4 = vector.load %arg4[%c0_4, %c0_5] : memref<1x128xf32, #tpu.memory_space<vmem>>, vector<1x128xf32>
    %5 = vector.broadcast %4 : vector<1x128xf32> to vector<64x128xf32>
    %6 = arith.addf %3, %5 : vector<64x128xf32>
    %7 = vector.shape_cast %6 : vector<64x128xf32> to vector<8x8x128xf32>
    %c0_6 = arith.constant 0 : index
    %c0_7 = arith.constant 0 : index
    %c0_8 = arith.constant 0 : index
    %8 = vector.load %arg10[%c0_6, %c0_7, %c0_8] : memref<8x8x128xf32, #tpu.memory_space<vmem>>, vector<8x8x128xf32>
    tpu.vector_store %arg10[%c0_6, %c0_7, %c0_8], %7 {strides = array<i32>} : memref<8x8x128xf32, #tpu.memory_space<vmem>>, vector<8x8x128xf32>,
    %c0_9 = arith.constant 0 : index
    %c0_10 = arith.constant 0 : index
    %9 = vector.load %arg3[%c0_9, %c0_10] : memref<32x128xf32, #tpu.memory_space<vmem>>, vector<32x128xf32>
    %c0_11 = arith.constant 0 : index
    %c0_12 = arith.constant 0 : index
    %10 = vector.load %arg5[%c0_11, %c0_12] : memref<64x128xf32, #tpu.memory_space<vmem>>, vector<64x128xf32>
    %c0_13 = arith.constant 0 : index
    %c0_14 = arith.constant 0 : index
    %11 = vector.load %arg6[%c0_13, %c0_14] : memref<1x128xf32, #tpu.memory_space<vmem>>, vector<1x128xf32>
    %cst_15 = arith.constant 0.000000e+00 : f32
    %12 = vector.broadcast %cst_15 : f32 to vector<8x32xf32>
    %c0_i32 = arith.constant 0 : i32
    %13 = arith.index_cast %c0_i32 : i32 to index
    %c0_16 = arith.constant 0 : index
    %c0_17 = arith.constant 0 : index
    %14 = vector.load %arg10[%13, %c0_16, %c0_17] : memref<8x8x128xf32, #tpu.memory_space<vmem>>, vector<1x8x128xf32>
    %15 = vector.shape_cast %14 : vector<1x8x128xf32> to vector<8x128xf32>
    %cst_18 = arith.constant dense<0.000000e+00> : vector<8x128xf32>
    %16 = tpu.matmul %12, %9, %cst_18 {dimension_numbers = #tpu.dot_dimension_numbers<[1], [0], [0], [1], [0, 0, 1, 1], [], []>} : vector<8x32xf32>, vector<32x128xf32>, vector<8x128xf32> -> vector<8x128xf32>
    %17 = arith.addf %15, %16 : vector<8x128xf32>
    %18 = arith.negf %17 : vector<8x128xf32>
    %19 = math.exp %18 : vector<8x128xf32>
    %cst_19 = arith.constant 1.000000e+00 : f32
    %20 = vector.broadcast %cst_19 : f32 to vector<8x128xf32>
    %21 = arith.addf %20, %19 : vector<8x128xf32>
    %22 = arith.divf %20, %21 : vector<8x128xf32>
    %23 = math.tanh %17 : vector<8x128xf32>
    %24 = vector.extract_strided_slice %22 {offsets = [0, 0], sizes = [8, 32], strides = [1, 1]} : vector<8x128xf32> to vector<8x32xf32>
    %25 = vector.extract_strided_slice %22 {offsets = [0, 32], sizes = [8, 32], strides = [1, 1]} : vector<8x128xf32> to vector<8x32xf32>
    %26 = vector.extract_strided_slice %23 {offsets = [0, 64], sizes = [8, 32], strides = [1, 1]} : vector<8x128xf32> to vector<8x32xf32>
    %27 = vector.extract_strided_slice %22 {offsets = [0, 96], sizes = [8, 32], strides = [1, 1]} : vector<8x128xf32> to vector<8x32xf32>
    %28 = arith.mulf %25, %12 : vector<8x32xf32>
    %29 = arith.mulf %24, %26 : vector<8x32xf32>
    %30 = arith.addf %28, %29 : vector<8x32xf32>
    %31 = math.tanh %30 : vector<8x32xf32>
    %32 = arith.mulf %27, %31 : vector<8x32xf32>
    %33 = tpu.concatenate %32, %12 in 1 : vector<8x32xf32>, vector<8x32xf32> -> vector<8x64xf32>
    %cst_20 = arith.constant dense<0.000000e+00> : vector<8x128xf32>
    %34 = tpu.matmul %33, %10, %cst_20 {dimension_numbers = #tpu.dot_dimension_numbers<[1], [0], [0], [1], [0, 0, 1, 1], [], []>} : vector<8x64xf32>, vector<64x128xf32>, vector<8x128xf32> -> vector<8x128xf32>
    %35 = vector.broadcast %11 : vector<1x128xf32> to vector<8x128xf32>
    %36 = arith.addf %34, %35 : vector<8x128xf32>
    %37 = arith.negf %36 : vector<8x128xf32>
    %38 = math.exp %37 : vector<8x128xf32>
    %cst_21 = arith.constant 1.000000e+00 : f32
    %39 = vector.broadcast %cst_21 : f32 to vector<8x128xf32>
    %40 = arith.addf %39, %38 : vector<8x128xf32>
    %41 = arith.divf %39, %40 : vector<8x128xf32>
    %42 = math.tanh %36 : vector<8x128xf32>
    %43 = vector.extract_strided_slice %41 {offsets = [0, 0], sizes = [8, 32], strides = [1, 1]} : vector<8x128xf32> to vector<8x32xf32>
    %44 = vector.extract_strided_slice %41 {offsets = [0, 32], sizes = [8, 32], strides = [1, 1]} : vector<8x128xf32> to vector<8x32xf32>
    %45 = vector.extract_strided_slice %42 {offsets = [0, 64], sizes = [8, 32], strides = [1, 1]} : vector<8x128xf32> to vector<8x32xf32>
    %46 = vector.extract_strided_slice %41 {offsets = [0, 96], sizes = [8, 32], strides = [1, 1]} : vector<8x128xf32> to vector<8x32xf32>
    %47 = arith.mulf %44, %12 : vector<8x32xf32>
    %48 = arith.mulf %43, %45 : vector<8x32xf32>
    %49 = arith.addf %47, %48 : vector<8x32xf32>
    %50 = math.tanh %49 : vector<8x32xf32>
    %51 = arith.mulf %46, %50 : vector<8x32xf32>
    %c1_i32 = arith.constant 1 : i32
    %52 = arith.index_cast %c1_i32 : i32 to index
    %c0_22 = arith.constant 0 : index
    %c0_23 = arith.constant 0 : index
    %53 = vector.load %arg10[%52, %c0_22, %c0_23] : memref<8x8x128xf32, #tpu.memory_space<vmem>>, vector<1x8x128xf32>
    %54 = vector.shape_cast %53 : vector<1x8x128xf32> to vector<8x128xf32>
    %cst_24 = arith.constant dense<0.000000e+00> : vector<8x128xf32>
    %55 = tpu.matmul %32, %9, %cst_24 {dimension_numbers = #tpu.dot_dimension_numbers<[1], [0], [0], [1], [0, 0, 1, 1], [], []>} : vector<8x32xf32>, vector<32x128xf32>, vector<8x128xf32> -> vector<8x128xf32>
    %56 = arith.addf %54, %55 : vector<8x128xf32>
    %57 = arith.negf %56 : vector<8x128xf32>
    %58 = math.exp %57 : vector<8x128xf32>
    %cst_25 = arith.constant 1.000000e+00 : f32
    %59 = vector.broadcast %cst_25 : f32 to vector<8x128xf32>
    %60 = arith.addf %59, %58 : vector<8x128xf32>
    %61 = arith.divf %59, %60 : vector<8x128xf32>
    %62 = math.tanh %56 : vector<8x128xf32>
    %63 = vector.extract_strided_slice %61 {offsets = [0, 0], sizes = [8, 32], strides = [1, 1]} : vector<8x128xf32> to vector<8x32xf32>
    %64 = vector.extract_strided_slice %61 {offsets = [0, 32], sizes = [8, 32], strides = [1, 1]} : vector<8x128xf32> to vector<8x32xf32>
    %65 = vector.extract_strided_slice %62 {offsets = [0, 64], sizes = [8, 32], strides = [1, 1]} : vector<8x128xf32> to vector<8x32xf32>
    %66 = vector.extract_strided_slice %61 {offsets = [0, 96], sizes = [8, 32], strides = [1, 1]} : vector<8x128xf32> to vector<8x32xf32>
    %67 = arith.mulf %64, %30 : vector<8x32xf32>
    %68 = arith.mulf %63, %65 : vector<8x32xf32>
    %69 = arith.addf %67, %68 : vector<8x32xf32>
    %70 = math.tanh %69 : vector<8x32xf32>
    %71 = arith.mulf %66, %70 : vector<8x32xf32>
    %72 = tpu.concatenate %71, %51 in 1 : vector<8x32xf32>, vector<8x32xf32> -> vector<8x64xf32>
    %cst_26 = arith.constant dense<0.000000e+00> : vector<8x128xf32>
    %73 = tpu.matmul %72, %10, %cst_26 {dimension_numbers = #tpu.dot_dimension_numbers<[1], [0], [0], [1], [0, 0, 1, 1], [], []>} : vector<8x64xf32>, vector<64x128xf32>, vector<8x128xf32> -> vector<8x128xf32>
    %74 = vector.broadcast %11 : vector<1x128xf32> to vector<8x128xf32>
    %75 = arith.addf %73, %74 : vector<8x128xf32>
    %76 = arith.negf %75 : vector<8x128xf32>
    %77 = math.exp %76 : vector<8x128xf32>
    %cst_27 = arith.constant 1.000000e+00 : f32
    %78 = vector.broadcast %cst_27 : f32 to vector<8x128xf32>
    %79 = arith.addf %78, %77 : vector<8x128xf32>
    %80 = arith.divf %78, %79 : vector<8x128xf32>
    %81 = math.tanh %75 : vector<8x128xf32>
    %82 = vector.extract_strided_slice %80 {offsets = [0, 0], sizes = [8, 32], strides = [1, 1]} : vector<8x128xf32> to vector<8x32xf32>
    %83 = vector.extract_strided_slice %80 {offsets = [0, 32], sizes = [8, 32], strides = [1, 1]} : vector<8x128xf32> to vector<8x32xf32>
    %84 = vector.extract_strided_slice %81 {offsets = [0, 64], sizes = [8, 32], strides = [1, 1]} : vector<8x128xf32> to vector<8x32xf32>
    %85 = vector.extract_strided_slice %80 {offsets = [0, 96], sizes = [8, 32], strides = [1, 1]} : vector<8x128xf32> to vector<8x32xf32>
    %86 = arith.mulf %83, %49 : vector<8x32xf32>
    %87 = arith.mulf %82, %84 : vector<8x32xf32>
    %88 = arith.addf %86, %87 : vector<8x32xf32>
    %89 = math.tanh %88 : vector<8x32xf32>
    %90 = arith.mulf %85, %89 : vector<8x32xf32>
    %c2_i32 = arith.constant 2 : i32
    %91 = arith.index_cast %c2_i32 : i32 to index
    %c0_28 = arith.constant 0 : index
    %c0_29 = arith.constant 0 : index
    %92 = vector.load %arg10[%91, %c0_28, %c0_29] : memref<8x8x128xf32, #tpu.memory_space<vmem>>, vector<1x8x128xf32>
    %93 = vector.shape_cast %92 : vector<1x8x128xf32> to vector<8x128xf32>
    %cst_30 = arith.constant dense<0.000000e+00> : vector<8x128xf32>
    %94 = tpu.matmul %71, %9, %cst_30 {dimension_numbers = #tpu.dot_dimension_numbers<[1], [0], [0], [1], [0, 0, 1, 1], [], []>} : vector<8x32xf32>, vector<32x128xf32>, vector<8x128xf32> -> vector<8x128xf32>
    %95 = arith.addf %93, %94 : vector<8x128xf32>
    %96 = arith.negf %95 : vector<8x128xf32>
    %97 = math.exp %96 : vector<8x128xf32>
    %cst_31 = arith.constant 1.000000e+00 : f32
    %98 = vector.broadcast %cst_31 : f32 to vector<8x128xf32>
    %99 = arith.addf %98, %97 : vector<8x128xf32>
    %100 = arith.divf %98, %99 : vector<8x128xf32>
    %101 = math.tanh %95 : vector<8x128xf32>
    %102 = vector.extract_strided_slice %100 {offsets = [0, 0], sizes = [8, 32], strides = [1, 1]} : vector<8x128xf32> to vector<8x32xf32>
    %103 = vector.extract_strided_slice %100 {offsets = [0, 32], sizes = [8, 32], strides = [1, 1]} : vector<8x128xf32> to vector<8x32xf32>
    %104 = vector.extract_strided_slice %101 {offsets = [0, 64], sizes = [8, 32], strides = [1, 1]} : vector<8x128xf32> to vector<8x32xf32>
    %105 = vector.extract_strided_slice %100 {offsets = [0, 96], sizes = [8, 32], strides = [1, 1]} : vector<8x128xf32> to vector<8x32xf32>
    %106 = arith.mulf %103, %69 : vector<8x32xf32>
    %107 = arith.mulf %102, %104 : vector<8x32xf32>
    %108 = arith.addf %106, %107 : vector<8x32xf32>
    %109 = math.tanh %108 : vector<8x32xf32>
    %110 = arith.mulf %105, %109 : vector<8x32xf32>
    %111 = tpu.concatenate %110, %90 in 1 : vector<8x32xf32>, vector<8x32xf32> -> vector<8x64xf32>
    %cst_32 = arith.constant dense<0.000000e+00> : vector<8x128xf32>
    %112 = tpu.matmul %111, %10, %cst_32 {dimension_numbers = #tpu.dot_dimension_numbers<[1], [0], [0], [1], [0, 0, 1, 1], [], []>} : vector<8x64xf32>, vector<64x128xf32>, vector<8x128xf32> -> vector<8x128xf32>
    %113 = vector.broadcast %11 : vector<1x128xf32> to vector<8x128xf32>
    %114 = arith.addf %112, %113 : vector<8x128xf32>
    %115 = arith.negf %114 : vector<8x128xf32>
    %116 = math.exp %115 : vector<8x128xf32>
    %cst_33 = arith.constant 1.000000e+00 : f32
    %117 = vector.broadcast %cst_33 : f32 to vector<8x128xf32>
    %118 = arith.addf %117, %116 : vector<8x128xf32>
    %119 = arith.divf %117, %118 : vector<8x128xf32>
    %120 = math.tanh %114 : vector<8x128xf32>
    %121 = vector.extract_strided_slice %119 {offsets = [0, 0], sizes = [8, 32], strides = [1, 1]} : vector<8x128xf32> to vector<8x32xf32>
    %122 = vector.extract_strided_slice %119 {offsets = [0, 32], sizes = [8, 32], strides = [1, 1]} : vector<8x128xf32> to vector<8x32xf32>
    %123 = vector.extract_strided_slice %120 {offsets = [0, 64], sizes = [8, 32], strides = [1, 1]} : vector<8x128xf32> to vector<8x32xf32>
    %124 = vector.extract_strided_slice %119 {offsets = [0, 96], sizes = [8, 32], strides = [1, 1]} : vector<8x128xf32> to vector<8x32xf32>
    %125 = arith.mulf %122, %88 : vector<8x32xf32>
    %126 = arith.mulf %121, %123 : vector<8x32xf32>
    %127 = arith.addf %125, %126 : vector<8x32xf32>
    %128 = math.tanh %127 : vector<8x32xf32>
    %129 = arith.mulf %124, %128 : vector<8x32xf32>
    %c3_i32 = arith.constant 3 : i32
    %130 = arith.index_cast %c3_i32 : i32 to index
    %c0_34 = arith.constant 0 : index
    %c0_35 = arith.constant 0 : index
    %131 = vector.load %arg10[%130, %c0_34, %c0_35] : memref<8x8x128xf32, #tpu.memory_space<vmem>>, vector<1x8x128xf32>
    %132 = vector.shape_cast %131 : vector<1x8x128xf32> to vector<8x128xf32>
    %cst_36 = arith.constant dense<0.000000e+00> : vector<8x128xf32>
    %133 = tpu.matmul %110, %9, %cst_36 {dimension_numbers = #tpu.dot_dimension_numbers<[1], [0], [0], [1], [0, 0, 1, 1], [], []>} : vector<8x32xf32>, vector<32x128xf32>, vector<8x128xf32> -> vector<8x128xf32>
    %134 = arith.addf %132, %133 : vector<8x128xf32>
    %135 = arith.negf %134 : vector<8x128xf32>
    %136 = math.exp %135 : vector<8x128xf32>
    %cst_37 = arith.constant 1.000000e+00 : f32
    %137 = vector.broadcast %cst_37 : f32 to vector<8x128xf32>
    %138 = arith.addf %137, %136 : vector<8x128xf32>
    %139 = arith.divf %137, %138 : vector<8x128xf32>
    %140 = math.tanh %134 : vector<8x128xf32>
    %141 = vector.extract_strided_slice %139 {offsets = [0, 0], sizes = [8, 32], strides = [1, 1]} : vector<8x128xf32> to vector<8x32xf32>
    %142 = vector.extract_strided_slice %139 {offsets = [0, 32], sizes = [8, 32], strides = [1, 1]} : vector<8x128xf32> to vector<8x32xf32>
    %143 = vector.extract_strided_slice %140 {offsets = [0, 64], sizes = [8, 32], strides = [1, 1]} : vector<8x128xf32> to vector<8x32xf32>
    %144 = vector.extract_strided_slice %139 {offsets = [0, 96], sizes = [8, 32], strides = [1, 1]} : vector<8x128xf32> to vector<8x32xf32>
    %145 = arith.mulf %142, %108 : vector<8x32xf32>
    %146 = arith.mulf %141, %143 : vector<8x32xf32>
    %147 = arith.addf %145, %146 : vector<8x32xf32>
    %148 = math.tanh %147 : vector<8x32xf32>
    %149 = arith.mulf %144, %148 : vector<8x32xf32>
    %150 = tpu.concatenate %149, %129 in 1 : vector<8x32xf32>, vector<8x32xf32> -> vector<8x64xf32>
    %cst_38 = arith.constant dense<0.000000e+00> : vector<8x128xf32>
    %151 = tpu.matmul %150, %10, %cst_38 {dimension_numbers = #tpu.dot_dimension_numbers<[1], [0], [0], [1], [0, 0, 1, 1], [], []>} : vector<8x64xf32>, vector<64x128xf32>, vector<8x128xf32> -> vector<8x128xf32>
    %152 = vector.broadcast %11 : vector<1x128xf32> to vector<8x128xf32>
    %153 = arith.addf %151, %152 : vector<8x128xf32>
    %154 = arith.negf %153 : vector<8x128xf32>
    %155 = math.exp %154 : vector<8x128xf32>
    %cst_39 = arith.constant 1.000000e+00 : f32
    %156 = vector.broadcast %cst_39 : f32 to vector<8x128xf32>
    %157 = arith.addf %156, %155 : vector<8x128xf32>
    %158 = arith.divf %156, %157 : vector<8x128xf32>
    %159 = math.tanh %153 : vector<8x128xf32>
    %160 = vector.extract_strided_slice %158 {offsets = [0, 0], sizes = [8, 32], strides = [1, 1]} : vector<8x128xf32> to vector<8x32xf32>
    %161 = vector.extract_strided_slice %158 {offsets = [0, 32], sizes = [8, 32], strides = [1, 1]} : vector<8x128xf32> to vector<8x32xf32>
    %162 = vector.extract_strided_slice %159 {offsets = [0, 64], sizes = [8, 32], strides = [1, 1]} : vector<8x128xf32> to vector<8x32xf32>
    %163 = vector.extract_strided_slice %158 {offsets = [0, 96], sizes = [8, 32], strides = [1, 1]} : vector<8x128xf32> to vector<8x32xf32>
    %164 = arith.mulf %161, %127 : vector<8x32xf32>
    %165 = arith.mulf %160, %162 : vector<8x32xf32>
    %166 = arith.addf %164, %165 : vector<8x32xf32>
    %167 = math.tanh %166 : vector<8x32xf32>
    %168 = arith.mulf %163, %167 : vector<8x32xf32>
    %c4_i32 = arith.constant 4 : i32
    %169 = arith.index_cast %c4_i32 : i32 to index
    %c0_40 = arith.constant 0 : index
    %c0_41 = arith.constant 0 : index
    %170 = vector.load %arg10[%169, %c0_40, %c0_41] : memref<8x8x128xf32, #tpu.memory_space<vmem>>, vector<1x8x128xf32>
    %171 = vector.shape_cast %170 : vector<1x8x128xf32> to vector<8x128xf32>
    %cst_42 = arith.constant dense<0.000000e+00> : vector<8x128xf32>
    %172 = tpu.matmul %149, %9, %cst_42 {dimension_numbers = #tpu.dot_dimension_numbers<[1], [0], [0], [1], [0, 0, 1, 1], [], []>} : vector<8x32xf32>, vector<32x128xf32>, vector<8x128xf32> -> vector<8x128xf32>
    %173 = arith.addf %171, %172 : vector<8x128xf32>
    %174 = arith.negf %173 : vector<8x128xf32>
    %175 = math.exp %174 : vector<8x128xf32>
    %cst_43 = arith.constant 1.000000e+00 : f32
    %176 = vector.broadcast %cst_43 : f32 to vector<8x128xf32>
    %177 = arith.addf %176, %175 : vector<8x128xf32>
    %178 = arith.divf %176, %177 : vector<8x128xf32>
    %179 = math.tanh %173 : vector<8x128xf32>
    %180 = vector.extract_strided_slice %178 {offsets = [0, 0], sizes = [8, 32], strides = [1, 1]} : vector<8x128xf32> to vector<8x32xf32>
    %181 = vector.extract_strided_slice %178 {offsets = [0, 32], sizes = [8, 32], strides = [1, 1]} : vector<8x128xf32> to vector<8x32xf32>
    %182 = vector.extract_strided_slice %179 {offsets = [0, 64], sizes = [8, 32], strides = [1, 1]} : vector<8x128xf32> to vector<8x32xf32>
    %183 = vector.extract_strided_slice %178 {offsets = [0, 96], sizes = [8, 32], strides = [1, 1]} : vector<8x128xf32> to vector<8x32xf32>
    %184 = arith.mulf %181, %147 : vector<8x32xf32>
    %185 = arith.mulf %180, %182 : vector<8x32xf32>
    %186 = arith.addf %184, %185 : vector<8x32xf32>
    %187 = math.tanh %186 : vector<8x32xf32>
    %188 = arith.mulf %183, %187 : vector<8x32xf32>
    %189 = tpu.concatenate %188, %168 in 1 : vector<8x32xf32>, vector<8x32xf32> -> vector<8x64xf32>
    %cst_44 = arith.constant dense<0.000000e+00> : vector<8x128xf32>
    %190 = tpu.matmul %189, %10, %cst_44 {dimension_numbers = #tpu.dot_dimension_numbers<[1], [0], [0], [1], [0, 0, 1, 1], [], []>} : vector<8x64xf32>, vector<64x128xf32>, vector<8x128xf32> -> vector<8x128xf32>
    %191 = vector.broadcast %11 : vector<1x128xf32> to vector<8x128xf32>
    %192 = arith.addf %190, %191 : vector<8x128xf32>
    %193 = arith.negf %192 : vector<8x128xf32>
    %194 = math.exp %193 : vector<8x128xf32>
    %cst_45 = arith.constant 1.000000e+00 : f32
    %195 = vector.broadcast %cst_45 : f32 to vector<8x128xf32>
    %196 = arith.addf %195, %194 : vector<8x128xf32>
    %197 = arith.divf %195, %196 : vector<8x128xf32>
    %198 = math.tanh %192 : vector<8x128xf32>
    %199 = vector.extract_strided_slice %197 {offsets = [0, 0], sizes = [8, 32], strides = [1, 1]} : vector<8x128xf32> to vector<8x32xf32>
    %200 = vector.extract_strided_slice %197 {offsets = [0, 32], sizes = [8, 32], strides = [1, 1]} : vector<8x128xf32> to vector<8x32xf32>
    %201 = vector.extract_strided_slice %198 {offsets = [0, 64], sizes = [8, 32], strides = [1, 1]} : vector<8x128xf32> to vector<8x32xf32>
    %202 = vector.extract_strided_slice %197 {offsets = [0, 96], sizes = [8, 32], strides = [1, 1]} : vector<8x128xf32> to vector<8x32xf32>
    %203 = arith.mulf %200, %166 : vector<8x32xf32>
    %204 = arith.mulf %199, %201 : vector<8x32xf32>
    %205 = arith.addf %203, %204 : vector<8x32xf32>
    %206 = math.tanh %205 : vector<8x32xf32>
    %207 = arith.mulf %202, %206 : vector<8x32xf32>
    %c5_i32 = arith.constant 5 : i32
    %208 = arith.index_cast %c5_i32 : i32 to index
    %c0_46 = arith.constant 0 : index
    %c0_47 = arith.constant 0 : index
    %209 = vector.load %arg10[%208, %c0_46, %c0_47] : memref<8x8x128xf32, #tpu.memory_space<vmem>>, vector<1x8x128xf32>
    %210 = vector.shape_cast %209 : vector<1x8x128xf32> to vector<8x128xf32>
    %cst_48 = arith.constant dense<0.000000e+00> : vector<8x128xf32>
    %211 = tpu.matmul %188, %9, %cst_48 {dimension_numbers = #tpu.dot_dimension_numbers<[1], [0], [0], [1], [0, 0, 1, 1], [], []>} : vector<8x32xf32>, vector<32x128xf32>, vector<8x128xf32> -> vector<8x128xf32>
    %212 = arith.addf %210, %211 : vector<8x128xf32>
    %213 = arith.negf %212 : vector<8x128xf32>
    %214 = math.exp %213 : vector<8x128xf32>
    %cst_49 = arith.constant 1.000000e+00 : f32
    %215 = vector.broadcast %cst_49 : f32 to vector<8x128xf32>
    %216 = arith.addf %215, %214 : vector<8x128xf32>
    %217 = arith.divf %215, %216 : vector<8x128xf32>
    %218 = math.tanh %212 : vector<8x128xf32>
    %219 = vector.extract_strided_slice %217 {offsets = [0, 0], sizes = [8, 32], strides = [1, 1]} : vector<8x128xf32> to vector<8x32xf32>
    %220 = vector.extract_strided_slice %217 {offsets = [0, 32], sizes = [8, 32], strides = [1, 1]} : vector<8x128xf32> to vector<8x32xf32>
    %221 = vector.extract_strided_slice %218 {offsets = [0, 64], sizes = [8, 32], strides = [1, 1]} : vector<8x128xf32> to vector<8x32xf32>
    %222 = vector.extract_strided_slice %217 {offsets = [0, 96], sizes = [8, 32], strides = [1, 1]} : vector<8x128xf32> to vector<8x32xf32>
    %223 = arith.mulf %220, %186 : vector<8x32xf32>
    %224 = arith.mulf %219, %221 : vector<8x32xf32>
    %225 = arith.addf %223, %224 : vector<8x32xf32>
    %226 = math.tanh %225 : vector<8x32xf32>
    %227 = arith.mulf %222, %226 : vector<8x32xf32>
    %228 = tpu.concatenate %227, %207 in 1 : vector<8x32xf32>, vector<8x32xf32> -> vector<8x64xf32>
    %cst_50 = arith.constant dense<0.000000e+00> : vector<8x128xf32>
    %229 = tpu.matmul %228, %10, %cst_50 {dimension_numbers = #tpu.dot_dimension_numbers<[1], [0], [0], [1], [0, 0, 1, 1], [], []>} : vector<8x64xf32>, vector<64x128xf32>, vector<8x128xf32> -> vector<8x128xf32>
    %230 = vector.broadcast %11 : vector<1x128xf32> to vector<8x128xf32>
    %231 = arith.addf %229, %230 : vector<8x128xf32>
    %232 = arith.negf %231 : vector<8x128xf32>
    %233 = math.exp %232 : vector<8x128xf32>
    %cst_51 = arith.constant 1.000000e+00 : f32
    %234 = vector.broadcast %cst_51 : f32 to vector<8x128xf32>
    %235 = arith.addf %234, %233 : vector<8x128xf32>
    %236 = arith.divf %234, %235 : vector<8x128xf32>
    %237 = math.tanh %231 : vector<8x128xf32>
    %238 = vector.extract_strided_slice %236 {offsets = [0, 0], sizes = [8, 32], strides = [1, 1]} : vector<8x128xf32> to vector<8x32xf32>
    %239 = vector.extract_strided_slice %236 {offsets = [0, 32], sizes = [8, 32], strides = [1, 1]} : vector<8x128xf32> to vector<8x32xf32>
    %240 = vector.extract_strided_slice %237 {offsets = [0, 64], sizes = [8, 32], strides = [1, 1]} : vector<8x128xf32> to vector<8x32xf32>
    %241 = vector.extract_strided_slice %236 {offsets = [0, 96], sizes = [8, 32], strides = [1, 1]} : vector<8x128xf32> to vector<8x32xf32>
    %242 = arith.mulf %239, %205 : vector<8x32xf32>
    %243 = arith.mulf %238, %240 : vector<8x32xf32>
    %244 = arith.addf %242, %243 : vector<8x32xf32>
    %245 = math.tanh %244 : vector<8x32xf32>
    %246 = arith.mulf %241, %245 : vector<8x32xf32>
    %c6_i32 = arith.constant 6 : i32
    %247 = arith.index_cast %c6_i32 : i32 to index
    %c0_52 = arith.constant 0 : index
    %c0_53 = arith.constant 0 : index
    %248 = vector.load %arg10[%247, %c0_52, %c0_53] : memref<8x8x128xf32, #tpu.memory_space<vmem>>, vector<1x8x128xf32>
    %249 = vector.shape_cast %248 : vector<1x8x128xf32> to vector<8x128xf32>
    %cst_54 = arith.constant dense<0.000000e+00> : vector<8x128xf32>
    %250 = tpu.matmul %227, %9, %cst_54 {dimension_numbers = #tpu.dot_dimension_numbers<[1], [0], [0], [1], [0, 0, 1, 1], [], []>} : vector<8x32xf32>, vector<32x128xf32>, vector<8x128xf32> -> vector<8x128xf32>
    %251 = arith.addf %249, %250 : vector<8x128xf32>
    %252 = arith.negf %251 : vector<8x128xf32>
    %253 = math.exp %252 : vector<8x128xf32>
    %cst_55 = arith.constant 1.000000e+00 : f32
    %254 = vector.broadcast %cst_55 : f32 to vector<8x128xf32>
    %255 = arith.addf %254, %253 : vector<8x128xf32>
    %256 = arith.divf %254, %255 : vector<8x128xf32>
    %257 = math.tanh %251 : vector<8x128xf32>
    %258 = vector.extract_strided_slice %256 {offsets = [0, 0], sizes = [8, 32], strides = [1, 1]} : vector<8x128xf32> to vector<8x32xf32>
    %259 = vector.extract_strided_slice %256 {offsets = [0, 32], sizes = [8, 32], strides = [1, 1]} : vector<8x128xf32> to vector<8x32xf32>
    %260 = vector.extract_strided_slice %257 {offsets = [0, 64], sizes = [8, 32], strides = [1, 1]} : vector<8x128xf32> to vector<8x32xf32>
    %261 = vector.extract_strided_slice %256 {offsets = [0, 96], sizes = [8, 32], strides = [1, 1]} : vector<8x128xf32> to vector<8x32xf32>
    %262 = arith.mulf %259, %225 : vector<8x32xf32>
    %263 = arith.mulf %258, %260 : vector<8x32xf32>
    %264 = arith.addf %262, %263 : vector<8x32xf32>
    %265 = math.tanh %264 : vector<8x32xf32>
    %266 = arith.mulf %261, %265 : vector<8x32xf32>
    %267 = tpu.concatenate %266, %246 in 1 : vector<8x32xf32>, vector<8x32xf32> -> vector<8x64xf32>
    %cst_56 = arith.constant dense<0.000000e+00> : vector<8x128xf32>
    %268 = tpu.matmul %267, %10, %cst_56 {dimension_numbers = #tpu.dot_dimension_numbers<[1], [0], [0], [1], [0, 0, 1, 1], [], []>} : vector<8x64xf32>, vector<64x128xf32>, vector<8x128xf32> -> vector<8x128xf32>
    %269 = vector.broadcast %11 : vector<1x128xf32> to vector<8x128xf32>
    %270 = arith.addf %268, %269 : vector<8x128xf32>
    %271 = arith.negf %270 : vector<8x128xf32>
    %272 = math.exp %271 : vector<8x128xf32>
    %cst_57 = arith.constant 1.000000e+00 : f32
    %273 = vector.broadcast %cst_57 : f32 to vector<8x128xf32>
    %274 = arith.addf %273, %272 : vector<8x128xf32>
    %275 = arith.divf %273, %274 : vector<8x128xf32>
    %276 = math.tanh %270 : vector<8x128xf32>
    %277 = vector.extract_strided_slice %275 {offsets = [0, 0], sizes = [8, 32], strides = [1, 1]} : vector<8x128xf32> to vector<8x32xf32>
    %278 = vector.extract_strided_slice %275 {offsets = [0, 32], sizes = [8, 32], strides = [1, 1]} : vector<8x128xf32> to vector<8x32xf32>
    %279 = vector.extract_strided_slice %276 {offsets = [0, 64], sizes = [8, 32], strides = [1, 1]} : vector<8x128xf32> to vector<8x32xf32>
    %280 = vector.extract_strided_slice %275 {offsets = [0, 96], sizes = [8, 32], strides = [1, 1]} : vector<8x128xf32> to vector<8x32xf32>
    %281 = arith.mulf %278, %244 : vector<8x32xf32>
    %282 = arith.mulf %277, %279 : vector<8x32xf32>
    %283 = arith.addf %281, %282 : vector<8x32xf32>
    %284 = math.tanh %283 : vector<8x32xf32>
    %285 = arith.mulf %280, %284 : vector<8x32xf32>
    %c7_i32 = arith.constant 7 : i32
    %286 = arith.index_cast %c7_i32 : i32 to index
    %c0_58 = arith.constant 0 : index
    %c0_59 = arith.constant 0 : index
    %287 = vector.load %arg10[%286, %c0_58, %c0_59] : memref<8x8x128xf32, #tpu.memory_space<vmem>>, vector<1x8x128xf32>
    %288 = vector.shape_cast %287 : vector<1x8x128xf32> to vector<8x128xf32>
    %cst_60 = arith.constant dense<0.000000e+00> : vector<8x128xf32>
    %289 = tpu.matmul %266, %9, %cst_60 {dimension_numbers = #tpu.dot_dimension_numbers<[1], [0], [0], [1], [0, 0, 1, 1], [], []>} : vector<8x32xf32>, vector<32x128xf32>, vector<8x128xf32> -> vector<8x128xf32>
    %290 = arith.addf %288, %289 : vector<8x128xf32>
    %291 = arith.negf %290 : vector<8x128xf32>
    %292 = math.exp %291 : vector<8x128xf32>
    %cst_61 = arith.constant 1.000000e+00 : f32
    %293 = vector.broadcast %cst_61 : f32 to vector<8x128xf32>
    %294 = arith.addf %293, %292 : vector<8x128xf32>
    %295 = arith.divf %293, %294 : vector<8x128xf32>
    %296 = math.tanh %290 : vector<8x128xf32>
    %297 = vector.extract_strided_slice %295 {offsets = [0, 0], sizes = [8, 32], strides = [1, 1]} : vector<8x128xf32> to vector<8x32xf32>
    %298 = vector.extract_strided_slice %295 {offsets = [0, 32], sizes = [8, 32], strides = [1, 1]} : vector<8x128xf32> to vector<8x32xf32>
    %299 = vector.extract_strided_slice %296 {offsets = [0, 64], sizes = [8, 32], strides = [1, 1]} : vector<8x128xf32> to vector<8x32xf32>
    %300 = vector.extract_strided_slice %295 {offsets = [0, 96], sizes = [8, 32], strides = [1, 1]} : vector<8x128xf32> to vector<8x32xf32>
    %301 = arith.mulf %298, %264 : vector<8x32xf32>
    %302 = arith.mulf %297, %299 : vector<8x32xf32>
    %303 = arith.addf %301, %302 : vector<8x32xf32>
    %304 = math.tanh %303 : vector<8x32xf32>
    %305 = arith.mulf %300, %304 : vector<8x32xf32>
    %306 = tpu.concatenate %305, %285 in 1 : vector<8x32xf32>, vector<8x32xf32> -> vector<8x64xf32>
    %cst_62 = arith.constant dense<0.000000e+00> : vector<8x128xf32>
    %307 = tpu.matmul %306, %10, %cst_62 {dimension_numbers = #tpu.dot_dimension_numbers<[1], [0], [0], [1], [0, 0, 1, 1], [], []>} : vector<8x64xf32>, vector<64x128xf32>, vector<8x128xf32> -> vector<8x128xf32>
    %308 = vector.broadcast %11 : vector<1x128xf32> to vector<8x128xf32>
    %309 = arith.addf %307, %308 : vector<8x128xf32>
    %310 = arith.negf %309 : vector<8x128xf32>
    %311 = math.exp %310 : vector<8x128xf32>
    %cst_63 = arith.constant 1.000000e+00 : f32
    %312 = vector.broadcast %cst_63 : f32 to vector<8x128xf32>
    %313 = arith.addf %312, %311 : vector<8x128xf32>
    %314 = arith.divf %312, %313 : vector<8x128xf32>
    %315 = math.tanh %309 : vector<8x128xf32>
    %316 = vector.extract_strided_slice %314 {offsets = [0, 0], sizes = [8, 32], strides = [1, 1]} : vector<8x128xf32> to vector<8x32xf32>
    %317 = vector.extract_strided_slice %314 {offsets = [0, 32], sizes = [8, 32], strides = [1, 1]} : vector<8x128xf32> to vector<8x32xf32>
    %318 = vector.extract_strided_slice %315 {offsets = [0, 64], sizes = [8, 32], strides = [1, 1]} : vector<8x128xf32> to vector<8x32xf32>
    %319 = vector.extract_strided_slice %314 {offsets = [0, 96], sizes = [8, 32], strides = [1, 1]} : vector<8x128xf32> to vector<8x32xf32>
    %320 = arith.mulf %317, %283 : vector<8x32xf32>
    %321 = arith.mulf %316, %318 : vector<8x32xf32>
    %322 = arith.addf %320, %321 : vector<8x32xf32>
    %323 = math.tanh %322 : vector<8x32xf32>
    %324 = arith.mulf %319, %323 : vector<8x32xf32>
    %c8_i32 = arith.constant 8 : i32
    %c0_64 = arith.constant 0 : index
    %c0_65 = arith.constant 0 : index
    %325 = vector.load %arg7[%c0_64, %c0_65] : memref<32x128xf32, #tpu.memory_space<vmem>>, vector<32x128xf32>
    %cst_66 = arith.constant dense<0.000000e+00> : vector<8x128xf32>
    %326 = tpu.matmul %324, %325, %cst_66 {dimension_numbers = #tpu.dot_dimension_numbers<[1], [0], [0], [1], [0, 0, 1, 1], [], []>} : vector<8x32xf32>, vector<32x128xf32>, vector<8x128xf32> -> vector<8x128xf32>
    %c0_67 = arith.constant 0 : index
    %c0_68 = arith.constant 0 : index
    %327 = vector.load %arg8[%c0_67, %c0_68] : memref<1x128xf32, #tpu.memory_space<vmem>>, vector<1x128xf32>
    %328 = vector.broadcast %327 : vector<1x128xf32> to vector<8x128xf32>
    %329 = arith.addf %326, %328 : vector<8x128xf32>
    %c0_69 = arith.constant 0 : index
    %c0_70 = arith.constant 0 : index
    %330 = vector.load %arg9[%c0_69, %c0_70] : memref<8x128xf32, #tpu.memory_space<vmem>>, vector<8x128xf32>
    tpu.vector_store %arg9[%c0_69, %c0_70], %329 {strides = array<i32>} : memref<8x128xf32, #tpu.memory_space<vmem>>, vector<8x128xf32>,
    return
  }
  func.func @transform_0(%arg0: i32) -> (i32, i32, i32) {
    %c0_i32 = arith.constant 0 : i32
    %c0_i32_0 = arith.constant 0 : i32
    %c0_i32_1 = arith.constant 0 : i32
    return %c0_i32, %arg0, %c0_i32_0 : i32, i32, i32
  }
  func.func @transform_1(%arg0: i32) -> (i32, i32) {
    %c0_i32 = arith.constant 0 : i32
    %c0_i32_0 = arith.constant 0 : i32
    %c0_i32_1 = arith.constant 0 : i32
    return %c0_i32, %c0_i32_0 : i32, i32
  }
  func.func @transform_2(%arg0: i32) -> (i32, i32) {
    %c0_i32 = arith.constant 0 : i32
    %c0_i32_0 = arith.constant 0 : i32
    %c0_i32_1 = arith.constant 0 : i32
    return %c0_i32, %c0_i32_0 : i32, i32
  }
  func.func @transform_3(%arg0: i32) -> (i32, i32) {
    %c0_i32 = arith.constant 0 : i32
    %c0_i32_0 = arith.constant 0 : i32
    %c0_i32_1 = arith.constant 0 : i32
    return %c0_i32, %c0_i32_0 : i32, i32
  }
  func.func @transform_4(%arg0: i32) -> (i32, i32) {
    %c0_i32 = arith.constant 0 : i32
    %c0_i32_0 = arith.constant 0 : i32
    %c0_i32_1 = arith.constant 0 : i32
    return %c0_i32, %c0_i32_0 : i32, i32
  }
  func.func @transform_5(%arg0: i32) -> (i32, i32) {
    %c0_i32 = arith.constant 0 : i32
    %c0_i32_0 = arith.constant 0 : i32
    %c0_i32_1 = arith.constant 0 : i32
    return %c0_i32, %c0_i32_0 : i32, i32
  }
  func.func @transform_6(%arg0: i32) -> (i32, i32) {
    %c0_i32 = arith.constant 0 : i32
    %c0_i32_0 = arith.constant 0 : i32
    %c0_i32_1 = arith.constant 0 : i32
    return %c0_i32, %c0_i32_0 : i32, i32
  }
  func.func @transform_7(%arg0: i32) -> (i32, i32) {
    %c0_i32 = arith.constant 0 : i32
    %c0_i32_0 = arith.constant 0 : i32
    %c0_i32_1 = arith.constant 0 : i32
    return %c0_i32, %c0_i32_0 : i32, i32
  }
  func.func @transform_8(%arg0: i32) -> (i32, i32) {
    %c0_i32 = arith.constant 0 : i32
    %c0_i32_0 = arith.constant 0 : i32
    return %arg0, %c0_i32 : i32, i32
  }
}

</mosaic_0001>

<llo_original>
// kernel: tpu_custom_call.1
$region0: #{tpu_custom_call.1}
  #allocation0 [shape = 'u32[]', space=smem, size = 0x4, offset = 0x4, fixed_abs, tag = 'smem constant byte address 0x4 - core index']
  #allocation1 [shape = 'u32[72,128]{1,0:T(1,128)}', space=vmem, size = 0x9000, scoped, tag = 'internal scratch']
  #allocation2 [shape = 'f32[8,8,128]{2,1,0:T(8,128)}', space=vmem, size = 0x8000, scoped, tag = 'scratch operand']
  %s0 = inlined_call_operand.hbm [shape: f32[8,8,32], index: 0, kind: input, shape index: {}]
  %s1 = inlined_call_operand.hbm [shape: f32[32,128], index: 1, kind: input, shape index: {}]
  %s2 = inlined_call_operand.hbm [shape: f32[32,128], index: 2, kind: input, shape index: {}]
  %s3 = inlined_call_operand.vmem [shape: f32[1,128], index: 3, kind: input, shape index: {}]
  %s4 = inlined_call_operand.hbm [shape: f32[64,128], index: 4, kind: input, shape index: {}]
  %s5 = inlined_call_operand.vmem [shape: f32[1,128], index: 5, kind: input, shape index: {}]
  %s6 = inlined_call_operand.hbm [shape: f32[32,128], index: 6, kind: input, shape index: {}]
  %s7 = inlined_call_operand.vmem [shape: f32[1,128], index: 7, kind: input, shape index: {}]
  %s8 = inlined_call_operand.hbm [shape: f32[8,128], index: 8, kind: output, shape index: {}]
  %s9 = sld [smem:[#allocation0]]
  $region62: #{tpu_custom_call.1} parent=0
    _
  %s11 = ssub.s32 1, %s9
  %s12 = scalar_select 0, %s11, %s9
  $region1: #{tpu_custom_call.1} parent=0
    #allocation3 [shape = 'u8[32768]{0}', space=vmem, size = 0x8000, scoped, tag = 'input window, operand 0, single buffered']
    #allocation4 [shape = 's32[1]{0}', space=sflag, size = 0x4, scoped, tag = 'scoped memory for tpu_custom_call.1']
    #allocation5 [shape = 's32[1]{0}', space=sflag, size = 0x4, scoped, tag = 'scoped memory for tpu_custom_call.1']
    #allocation6 [shape = 'u8[16384]{0}', space=vmem, size = 0x4000, scoped, tag = 'input window, operand 1, single buffered']
    #allocation7 [shape = 's32[1]{0}', space=sflag, size = 0x4, scoped, tag = 'scoped memory for tpu_custom_call.1']
    #allocation8 [shape = 'u8[16384]{0}', space=vmem, size = 0x4000, scoped, tag = 'input window, operand 2, single buffered']
    #allocation9 [shape = 'u8[32768]{0}', space=vmem, size = 0x8000, scoped, tag = 'input window, operand 4, single buffered']
    #allocation10 [shape = 's32[1]{0}', space=sflag, size = 0x4, scoped, tag = 'scoped memory for tpu_custom_call.1']
    #allocation11 [shape = 'u8[16384]{0}', space=vmem, size = 0x4000, scoped, tag = 'input window, operand 6, single buffered']
    #allocation12 [shape = 'u8[4096]{0}', space=vmem, size = 0x1000, scoped, tag = 'output window, operand 0, single buffered']
    %13 = vsyncpa [#allocation4], 0
    %14 = vsyncpa [#allocation7], 0
    %15 = vsyncpa [#allocation10], 0
    %16 = vsyncpa [#allocation5], 0
    // Predicated region
    $region2: #{tpu_custom_call.1} parent=1 // pred_check
      _
    $region3: #{tpu_custom_call.1} parent=1 // pred_check_branch
      %18 = sbr.rel (0) target = $region5
    $region4: #{tpu_custom_call.1} parent=1 // pred_region
      %20 = vsyncadd [#allocation4], 0
      %s21 = sshll.u32 %s0, 4
      %s22 = int_to_ptr.hbm [resolvable:$true] %s21
      %s23 = sshll.u32 [#allocation3], 4
      %s24 = int_to_ptr.vmem [resolvable:$true] %s23
      %29 = dma.hbm_to_vmem [thread:$0]  %s22, 1024, %s24, [#allocation4], 128, 128, 8
    $region5: #{tpu_custom_call.1} parent=1 // pred_fallthru
      _
    // Predicated region
    $region6: #{tpu_custom_call.1} parent=1 // pred_check
      _
    $region7: #{tpu_custom_call.1} parent=1 // pred_check_branch
      %31 = sbr.rel (0) target = $region9
    $region8: #{tpu_custom_call.1} parent=1 // pred_region
      %33 = vsyncadd [#allocation7], 0
      %s34 = sshll.u32 %s1, 4
      %s35 = int_to_ptr.hbm [resolvable:$true] %s34
      %s36 = sshll.u32 [#allocation6], 4
      %s37 = int_to_ptr.vmem [resolvable:$true] %s36
      %42 = dma.hbm_to_vmem [thread:$0]  %s35, 512, %s37, [#allocation7], 128, 128, 8
    $region9: #{tpu_custom_call.1} parent=1 // pred_fallthru
      _
    // Predicated region
    $region10: #{tpu_custom_call.1} parent=1 // pred_check
      _
    $region11: #{tpu_custom_call.1} parent=1 // pred_check_branch
      %44 = sbr.rel (0) target = $region13
    $region12: #{tpu_custom_call.1} parent=1 // pred_region
      %46 = vsyncadd [#allocation7], 0
      %s47 = sshll.u32 %s2, 4
      %s48 = int_to_ptr.hbm [resolvable:$true] %s47
      %s49 = sshll.u32 [#allocation8], 4
      %s50 = int_to_ptr.vmem [resolvable:$true] %s49
      %55 = dma.hbm_to_vmem [thread:$0]  %s48, 512, %s50, [#allocation7], 128, 128, 8
    $region13: #{tpu_custom_call.1} parent=1 // pred_fallthru
      _
    // Predicated region
    $region14: #{tpu_custom_call.1} parent=1 // pred_check
      _
    $region15: #{tpu_custom_call.1} parent=1 // pred_check_branch
      %57 = sbr.rel (0) target = $region17
    $region16: #{tpu_custom_call.1} parent=1 // pred_region
      _
    $region17: #{tpu_custom_call.1} parent=1 // pred_fallthru
      _
    // Predicated region
    $region18: #{tpu_custom_call.1} parent=1 // pred_check
      _
    $region19: #{tpu_custom_call.1} parent=1 // pred_check_branch
      %59 = sbr.rel (0) target = $region21
    $region20: #{tpu_custom_call.1} parent=1 // pred_region
      %61 = vsyncadd [#allocation10], 0
      %s62 = sshll.u32 %s4, 4
      %s63 = int_to_ptr.hbm [resolvable:$true] %s62
      %s64 = sshll.u32 [#allocation9], 4
      %s65 = int_to_ptr.vmem [resolvable:$true] %s64
      %70 = dma.hbm_to_vmem [thread:$0]  %s63, 1024, %s65, [#allocation10], 128, 128, 8
    $region21: #{tpu_custom_call.1} parent=1 // pred_fallthru
      _
    // Predicated region
    $region22: #{tpu_custom_call.1} parent=1 // pred_check
      _
    $region23: #{tpu_custom_call.1} parent=1 // pred_check_branch
      %72 = sbr.rel (0) target = $region25
    $region24: #{tpu_custom_call.1} parent=1 // pred_region
      _
    $region25: #{tpu_custom_call.1} parent=1 // pred_fallthru
      _
    // Predicated region
    $region26: #{tpu_custom_call.1} parent=1 // pred_check
      _
    $region27: #{tpu_custom_call.1} parent=1 // pred_check_branch
      %74 = sbr.rel (0) target = $region29
    $region28: #{tpu_custom_call.1} parent=1 // pred_region
      %76 = vsyncadd [#allocation10], 0
      %s77 = sshll.u32 %s6, 4
      %s78 = int_to_ptr.hbm [resolvable:$true] %s77
      %s79 = sshll.u32 [#allocation11], 4
      %s80 = int_to_ptr.vmem [resolvable:$true] %s79
      %85 = dma.hbm_to_vmem [thread:$0]  %s78, 512, %s80, [#allocation10], 128, 128, 8
    $region29: #{tpu_custom_call.1} parent=1 // pred_fallthru
      _
    // Predicated region
    $region30: #{tpu_custom_call.1} parent=1 // pred_check
      _
    $region31: #{tpu_custom_call.1} parent=1 // pred_check_branch
      %87 = sbr.rel (0) target = $region33
    $region32: #{tpu_custom_call.1} parent=1 // pred_region
      _
    $region33: #{tpu_custom_call.1} parent=1 // pred_fallthru
      _
    // Predicated region
    $region34: #{tpu_custom_call.1} parent=1 // pred_check
      _
    $region35: #{tpu_custom_call.1} parent=1 // pred_check_branch
      %89 = sbr.rel (0) target = $region37
    $region36: #{tpu_custom_call.1} parent=1 // pred_region
      %91 = dma.done [#allocation4], 1024
    $region37: #{tpu_custom_call.1} parent=1 // pred_fallthru
      _
    // Predicated region
    $region38: #{tpu_custom_call.1} parent=1 // pred_check
      _
    $region39: #{tpu_custom_call.1} parent=1 // pred_check_branch
      %93 = sbr.rel (0) target = $region41
    $region40: #{tpu_custom_call.1} parent=1 // pred_region
      %95 = dma.done [#allocation7], 512
    $region41: #{tpu_custom_call.1} parent=1 // pred_fallthru
      _
    // Predicated region
    $region42: #{tpu_custom_call.1} parent=1 // pred_check
      _
    $region43: #{tpu_custom_call.1} parent=1 // pred_check_branch
      %97 = sbr.rel (0) target = $region45
    $region44: #{tpu_custom_call.1} parent=1 // pred_region
      %99 = dma.done [#allocation7], 512
    $region45: #{tpu_custom_call.1} parent=1 // pred_fallthru
      _
    // Predicated region
    $region46: #{tpu_custom_call.1} parent=1 // pred_check
      _
    $region47: #{tpu_custom_call.1} parent=1 // pred_check_branch
      %101 = sbr.rel (0) target = $region49
    $region48: #{tpu_custom_call.1} parent=1 // pred_region
      %103 = dma.done [#allocation10], 1024
    $region49: #{tpu_custom_call.1} parent=1 // pred_fallthru
      _
    // Predicated region
    $region50: #{tpu_custom_call.1} parent=1 // pred_check
      _
    $region51: #{tpu_custom_call.1} parent=1 // pred_check_branch
      %105 = sbr.rel (0) target = $region53
    $region52: #{tpu_custom_call.1} parent=1 // pred_region
      %107 = dma.done [#allocation10], 512
    $region53: #{tpu_custom_call.1} parent=1 // pred_fallthru
      _
    %v108 = vld [vmem:[#allocation3] sm:$0xff]
    %v109 = vld [vmem:[#allocation3 + $0x8] sm:$0xff]
    %v110 = vld [vmem:[#allocation3 + $0x10] sm:$0xff]
    %v111 = vld [vmem:[#allocation3 + $0x18] sm:$0xff]
    %v112 = vld [vmem:[#allocation3 + $0x20] sm:$0xff]
    %v113 = vld [vmem:[#allocation3 + $0x28] sm:$0xff]
    %v114 = vld [vmem:[#allocation3 + $0x30] sm:$0xff]
    %v115 = vld [vmem:[#allocation3 + $0x38] sm:$0xff]
    %v116 = vld [vmem:[#allocation6] sm:$0xff]
    %v117 = vld [vmem:[#allocation6 + $0x8] sm:$0xff]
    %v118 = vld [vmem:[#allocation6 + $0x10] sm:$0xff]
    %v119 = vld [vmem:[#allocation6 + $0x18] sm:$0xff]
    %v120 = vld [vmem:[%s3] sm:$0x1]
    %v122 = vperm.slane %v120, 0
    %vm124 = vcmask 261120
    %v126 = vsel %vm124, %v108, 0
    %v129 = vsel %vm124, %v109, 0
    %v132 = vsel %vm124, %v110, 0
    %v135 = vsel %vm124, %v111, 0
    %v138 = vsel %vm124, %v112, 0
    %v141 = vsel %vm124, %v113, 0
    %v144 = vsel %vm124, %v114, 0
    %v147 = vsel %vm124, %v115, 0
    %149 = vmatpush.msra.mxu0 0.0
    %150 = vmatpush.msra.mxu0 0.0
    %151 = vmatpush.msra.mxu0 0.0
    %152 = vmatpush.msra.mxu0 0.0
    %153 = vmatpush.msra.mxu0 0.0
    %154 = vmatpush.msra.mxu0 0.0
    %155 = vmatpush.msra.mxu0 0.0
    %156 = vmatpush.msra.mxu0 0.0
    %157 = vmatpush.msra.mxu0 0.0
    %158 = vmatpush.msra.mxu0 0.0
    %159 = vmatpush.msra.mxu0 0.0
    %160 = vmatpush.msra.mxu0 0.0
    %161 = vmatpush.msra.mxu0 %v119
    %162 = vmatpush.msra.mxu0 %v118
    %163 = vmatpush.msra.mxu0 %v117
    %164 = vmatpush.msra.mxu0 %v116
    %165 = vmatmul.f32.gmra.mxu0 %v126
    %v166 = vpop.f32.mrf.mxu0
    %v167 = vadd.f32 %v122, %v166
    %168 = vmatmul.f32.gmra.mxu0 %v129
    %v169 = vpop.f32.mrf.mxu0
    %v170 = vadd.f32 %v122, %v169
    %171 = vmatmul.f32.gmra.mxu0 %v132
    %v172 = vpop.f32.mrf.mxu0
    %v173 = vadd.f32 %v122, %v172
    %174 = vmatmul.f32.gmra.mxu0 %v135
    %v175 = vpop.f32.mrf.mxu0
    %v176 = vadd.f32 %v122, %v175
    %177 = vmatmul.f32.gmra.mxu0 %v138
    %v178 = vpop.f32.mrf.mxu0
    %v179 = vadd.f32 %v122, %v178
    %180 = vmatmul.f32.gmra.mxu0 %v141
    %v181 = vpop.f32.mrf.mxu0
    %v182 = vadd.f32 %v122, %v181
    %183 = vmatmul.f32.gmra.mxu0 %v144
    %v184 = vpop.f32.mrf.mxu0
    %v185 = vadd.f32 %v122, %v184
    %186 = vmatmul.f32.gmra.mxu0 %v147
    %v187 = vpop.f32.mrf.mxu0
    %v188 = vadd.f32 %v122, %v187
    %189 = vdwg.mxu0
    %190 = vst [vmem:[#allocation2] sm:$0xff] %v167
    %191 = vst [vmem:[#allocation2 + $0x8] sm:$0xff] %v170
    %192 = vst [vmem:[#allocation2 + $0x10] sm:$0xff] %v173
    %193 = vst [vmem:[#allocation2 + $0x18] sm:$0xff] %v176
    %194 = vst [vmem:[#allocation2 + $0x20] sm:$0xff] %v179
    %195 = vst [vmem:[#allocation2 + $0x28] sm:$0xff] %v182
    %196 = vst [vmem:[#allocation2 + $0x30] sm:$0xff] %v185
    %197 = vst [vmem:[#allocation2 + $0x38] sm:$0xff] %v188
    %v198 = vld [vmem:[#allocation8] sm:$0xff]
    %v199 = vld [vmem:[#allocation8 + $0x8] sm:$0xff]
    %v200 = vld [vmem:[#allocation8 + $0x10] sm:$0xff]
    %v201 = vld [vmem:[#allocation8 + $0x18] sm:$0xff]
    %v202 = vld [vmem:[#allocation9] sm:$0xff]
    %v203 = vld [vmem:[#allocation9 + $0x8] sm:$0xff]
    %v204 = vld [vmem:[#allocation9 + $0x10] sm:$0xff]
    %v205 = vld [vmem:[#allocation9 + $0x18] sm:$0xff]
    %v206 = vld [vmem:[#allocation9 + $0x20] sm:$0xff]
    %v207 = vld [vmem:[#allocation9 + $0x28] sm:$0xff]
    %v208 = vld [vmem:[#allocation9 + $0x30] sm:$0xff]
    %v209 = vld [vmem:[#allocation9 + $0x38] sm:$0xff]
    %v210 = vld [vmem:[%s5] sm:$0x1]
    %v211 = vld [vmem:[#allocation2] sm:$0xff]
    %v213 = vsel %vm124, 0.0, 0
    %215 = vmatpush.msra.mxu0 0.0
    %216 = vmatpush.msra.mxu0 0.0
    %217 = vmatpush.msra.mxu0 0.0
    %218 = vmatpush.msra.mxu0 0.0
    %219 = vmatpush.msra.mxu0 0.0
    %220 = vmatpush.msra.mxu0 0.0
    %221 = vmatpush.msra.mxu0 0.0
    %222 = vmatpush.msra.mxu0 0.0
    %223 = vmatpush.msra.mxu0 0.0
    %224 = vmatpush.msra.mxu0 0.0
    %225 = vmatpush.msra.mxu0 0.0
    %226 = vmatpush.msra.mxu0 0.0
    %227 = vmatpush.msra.mxu0 %v201
    %228 = vmatpush.msra.mxu0 %v200
    %229 = vmatpush.msra.mxu0 %v199
    %230 = vmatpush.msra.mxu0 %v198
    %231 = vmatmul.f32.gmra.mxu0 %v213
    %v232 = vpop.f32.mrf.mxu0
    %v233 = vadd.f32 0.0, %v232
    %234 = vdwg.mxu0
    %v235 = vadd.f32 %v211, %v233
    %v236 = vxor.u32 %v235, 2147483648
    %v237 = vmul.f32 %v236, 1.442695
    %v238 = vpow.pop %v237
    %v239 = vadd.f32 %v238, 1.0
    %v240 = vrcp.pop %v239
    %v241 = vmul.f32 %v239, %v240
    %v242 = vsub.f32 1.0, %v241
    %v243 = vmul.f32 %v240, %v242
    %v244 = vadd.f32 %v240, %v243
    %vm245 = vweird.f32 %v239
    %vm246 = vweird.f32 %v240
    %vm247 = vmor %vm245, %vm246
    %v248 = vsel %vm247, %v240, %v244
    %v249 = vand.u32 2147483647, %v239
    %vm250 = vcmp.eq.f32.partialorder %v249, 8.507059e+37
    %v251 = vand.u32 %v239, 2147483648
    %v252 = vor.u32 1.1754944e-38, %v251
    %v253 = vsel %vm250, %v252, %v248
    %v254 = vmul.f32 1.0, %v253
    %v255 = vtanh.pop %v235
    %v256 = vmul.f32 %v254, 0.0
    %258 = vrot.lane.b32.xlu0 %v255, 64
    %v259 = vpop.permute.xlu0 %258
    %v261 = vmul.f32 %v254, %v259
    %263 = vrot.lane.b32.xlu0 %v261, 32
    %v264 = vpop.permute.xlu0 %263
    %v266 = vadd.f32 %v256, %v264
    %v267 = vtanh.pop %v266
    %269 = vrot.lane.b32.xlu0 %v267, 64
    %v270 = vpop.permute.xlu0 %269
    %v272 = vmul.f32 %v254, %v270
    %274 = vrot.lane.b32.xlu0 %v272, 32
    %v275 = vpop.permute.xlu0 %274
    %v277 = vsel %vm124, %v275, 0.0
    %v279 = vperm.slane %v210, 0
    %vm281 = vcmask 523264
    %v283 = vsel %vm281, %v277, 0
    %285 = vmatpush.msra.mxu0 0.0
    %286 = vmatpush.msra.mxu0 0.0
    %287 = vmatpush.msra.mxu0 0.0
    %288 = vmatpush.msra.mxu0 0.0
    %289 = vmatpush.msra.mxu0 0.0
    %290 = vmatpush.msra.mxu0 0.0
    %291 = vmatpush.msra.mxu0 0.0
    %292 = vmatpush.msra.mxu0 0.0
    %293 = vmatpush.msra.mxu0 %v209
    %294 = vmatpush.msra.mxu0 %v208
    %295 = vmatpush.msra.mxu0 %v207
    %296 = vmatpush.msra.mxu0 %v206
    %297 = vmatpush.msra.mxu0 %v205
    %298 = vmatpush.msra.mxu0 %v204
    %299 = vmatpush.msra.mxu0 %v203
    %300 = vmatpush.msra.mxu0 %v202
    %301 = vmatmul.f32.gmra.mxu0 %v283
    %v302 = vpop.f32.mrf.mxu0
    %v303 = vadd.f32 %v279, %v302
    %304 = vdwg.mxu0
    %v305 = vxor.u32 %v303, 2147483648
    %v306 = vmul.f32 %v305, 1.442695
    %v307 = vpow.pop %v306
    %v308 = vadd.f32 %v307, 1.0
    %v309 = vrcp.pop %v308
    %v310 = vmul.f32 %v308, %v309
    %v311 = vsub.f32 1.0, %v310
    %v312 = vmul.f32 %v309, %v311
    %v313 = vadd.f32 %v309, %v312
    %vm314 = vweird.f32 %v308
    %vm315 = vweird.f32 %v309
    %vm316 = vmor %vm314, %vm315
    %v317 = vsel %vm316, %v309, %v313
    %v318 = vand.u32 2147483647, %v308
    %vm319 = vcmp.eq.f32.partialorder %v318, 8.507059e+37
    %v320 = vand.u32 %v308, 2147483648
    %v321 = vor.u32 1.1754944e-38, %v320
    %v322 = vsel %vm319, %v321, %v317
    %v323 = vmul.f32 1.0, %v322
    %v324 = vtanh.pop %v303
    %v325 = vmul.f32 %v323, 0.0
    %327 = vrot.lane.b32.xlu0 %v324, 64
    %v328 = vpop.permute.xlu0 %327
    %v330 = vmul.f32 %v323, %v328
    %332 = vrot.lane.b32.xlu0 %v330, 32
    %v333 = vpop.permute.xlu0 %332
    %v335 = vadd.f32 %v325, %v333
    %v336 = vtanh.pop %v335
    %338 = vrot.lane.b32.xlu0 %v336, 64
    %v339 = vpop.permute.xlu0 %338
    %v341 = vmul.f32 %v323, %v339
    %s342 = scalar_lea.vmem [#allocation2], 8
    %v343 = vld [vmem:[%s342] sm:$0xff]
    %v344 = vsel %vm124, %v275, 0
    %346 = vmatpush.msra.mxu0 0.0
    %347 = vmatpush.msra.mxu0 0.0
    %348 = vmatpush.msra.mxu0 0.0
    %349 = vmatpush.msra.mxu0 0.0
    %350 = vmatpush.msra.mxu0 0.0
    %351 = vmatpush.msra.mxu0 0.0
    %352 = vmatpush.msra.mxu0 0.0
    %353 = vmatpush.msra.mxu0 0.0
    %354 = vmatpush.msra.mxu0 0.0
    %355 = vmatpush.msra.mxu0 0.0
    %356 = vmatpush.msra.mxu0 0.0
    %357 = vmatpush.msra.mxu0 0.0
    %358 = vmatpush.msra.mxu0 %v201
    %359 = vmatpush.msra.mxu0 %v200
    %360 = vmatpush.msra.mxu0 %v199
    %361 = vmatpush.msra.mxu0 %v198
    %362 = vmatmul.f32.gmra.mxu0 %v344
    %v363 = vpop.f32.mrf.mxu0
    %v364 = vadd.f32 0.0, %v363
    %365 = vdwg.mxu0
    %v366 = vadd.f32 %v343, %v364
    %v367 = vxor.u32 %v366, 2147483648
    %v368 = vmul.f32 %v367, 1.442695
    %v369 = vpow.pop %v368
    %v370 = vadd.f32 %v369, 1.0
    %v371 = vrcp.pop %v370
    %v372 = vmul.f32 %v370, %v371
    %v373 = vsub.f32 1.0, %v372
    %v374 = vmul.f32 %v371, %v373
    %v375 = vadd.f32 %v371, %v374
    %vm376 = vweird.f32 %v370
    %vm377 = vweird.f32 %v371
    %vm378 = vmor %vm376, %vm377
    %v379 = vsel %vm378, %v371, %v375
    %v380 = vand.u32 2147483647, %v370
    %vm381 = vcmp.eq.f32.partialorder %v380, 8.507059e+37
    %v382 = vand.u32 %v370, 2147483648
    %v383 = vor.u32 1.1754944e-38, %v382
    %v384 = vsel %vm381, %v383, %v379
    %v385 = vmul.f32 1.0, %v384
    %v386 = vtanh.pop %v366
    %v387 = vmul.f32 %v385, %v266
    %389 = vrot.lane.b32.xlu0 %v386, 64
    %v390 = vpop.permute.xlu0 %389
    %v392 = vmul.f32 %v385, %v390
    %394 = vrot.lane.b32.xlu0 %v392, 32
    %v395 = vpop.permute.xlu0 %394
    %v397 = vadd.f32 %v387, %v395
    %v398 = vtanh.pop %v397
    %400 = vrot.lane.b32.xlu0 %v398, 64
    %v401 = vpop.permute.xlu0 %400
    %v403 = vmul.f32 %v385, %v401
    %405 = vrot.lane.b32.xlu0 %v403, 32
    %v406 = vpop.permute.xlu0 %405
    %409 = vrot.lane.b32.xlu0 %v341, 64
    %v410 = vpop.permute.xlu0 %409
    %v412 = vsel %vm124, %v406, %v410
    %v414 = vsel %vm281, %v412, 0
    %416 = vmatpush.msra.mxu0 0.0
    %417 = vmatpush.msra.mxu0 0.0
    %418 = vmatpush.msra.mxu0 0.0
    %419 = vmatpush.msra.mxu0 0.0
    %420 = vmatpush.msra.mxu0 0.0
    %421 = vmatpush.msra.mxu0 0.0
    %422 = vmatpush.msra.mxu0 0.0
    %423 = vmatpush.msra.mxu0 0.0
    %424 = vmatpush.msra.mxu0 %v209
    %425 = vmatpush.msra.mxu0 %v208
    %426 = vmatpush.msra.mxu0 %v207
    %427 = vmatpush.msra.mxu0 %v206
    %428 = vmatpush.msra.mxu0 %v205
    %429 = vmatpush.msra.mxu0 %v204
    %430 = vmatpush.msra.mxu0 %v203
    %431 = vmatpush.msra.mxu0 %v202
    %432 = vmatmul.f32.gmra.mxu0 %v414
    %v433 = vpop.f32.mrf.mxu0
    %v434 = vadd.f32 %v279, %v433
    %435 = vdwg.mxu0
    %v436 = vxor.u32 %v434, 2147483648
    %v437 = vmul.f32 %v436, 1.442695
    %v438 = vpow.pop %v437
    %v439 = vadd.f32 %v438, 1.0
    %v440 = vrcp.pop %v439
    %v441 = vmul.f32 %v439, %v440
    %v442 = vsub.f32 1.0, %v441
    %v443 = vmul.f32 %v440, %v442
    %v444 = vadd.f32 %v440, %v443
    %vm445 = vweird.f32 %v439
    %vm446 = vweird.f32 %v440
    %vm447 = vmor %vm445, %vm446
    %v448 = vsel %vm447, %v440, %v444
    %v449 = vand.u32 2147483647, %v439
    %vm450 = vcmp.eq.f32.partialorder %v449, 8.507059e+37
    %v451 = vand.u32 %v439, 2147483648
    %v452 = vor.u32 1.1754944e-38, %v451
    %v453 = vsel %vm450, %v452, %v448
    %v454 = vmul.f32 1.0, %v453
    %v455 = vtanh.pop %v434
    %v456 = vmul.f32 %v454, %v335
    %458 = vrot.lane.b32.xlu0 %v455, 64
    %v459 = vpop.permute.xlu0 %458
    %v461 = vmul.f32 %v454, %v459
    %463 = vrot.lane.b32.xlu0 %v461, 32
    %v464 = vpop.permute.xlu0 %463
    %v466 = vadd.f32 %v456, %v464
    %v467 = vtanh.pop %v466
    %469 = vrot.lane.b32.xlu0 %v467, 64
    %v470 = vpop.permute.xlu0 %469
    %v472 = vmul.f32 %v454, %v470
    %s473 = scalar_lea.vmem [#allocation2], 16
    %v474 = vld [vmem:[%s473] sm:$0xff]
    %v475 = vsel %vm124, %v406, 0
    %477 = vmatpush.msra.mxu0 0.0
    %478 = vmatpush.msra.mxu0 0.0
    %479 = vmatpush.msra.mxu0 0.0
    %480 = vmatpush.msra.mxu0 0.0
    %481 = vmatpush.msra.mxu0 0.0
    %482 = vmatpush.msra.mxu0 0.0
    %483 = vmatpush.msra.mxu0 0.0
    %484 = vmatpush.msra.mxu0 0.0
    %485 = vmatpush.msra.mxu0 0.0
    %486 = vmatpush.msra.mxu0 0.0
    %487 = vmatpush.msra.mxu0 0.0
    %488 = vmatpush.msra.mxu0 0.0
    %489 = vmatpush.msra.mxu0 %v201
    %490 = vmatpush.msra.mxu0 %v200
    %491 = vmatpush.msra.mxu0 %v199
    %492 = vmatpush.msra.mxu0 %v198
    %493 = vmatmul.f32.gmra.mxu0 %v475
    %v494 = vpop.f32.mrf.mxu0
    %v495 = vadd.f32 0.0, %v494
    %496 = vdwg.mxu0
    %v497 = vadd.f32 %v474, %v495
    %v498 = vxor.u32 %v497, 2147483648
    %v499 = vmul.f32 %v498, 1.442695
    %v500 = vpow.pop %v499
    %v501 = vadd.f32 %v500, 1.0
    %v502 = vrcp.pop %v501
    %v503 = vmul.f32 %v501, %v502
    %v504 = vsub.f32 1.0, %v503
    %v505 = vmul.f32 %v502, %v504
    %v506 = vadd.f32 %v502, %v505
    %vm507 = vweird.f32 %v501
    %vm508 = vweird.f32 %v502
    %vm509 = vmor %vm507, %vm508
    %v510 = vsel %vm509, %v502, %v506
    %v511 = vand.u32 2147483647, %v501
    %vm512 = vcmp.eq.f32.partialorder %v511, 8.507059e+37
    %v513 = vand.u32 %v501, 2147483648
    %v514 = vor.u32 1.1754944e-38, %v513
    %v515 = vsel %vm512, %v514, %v510
    %v516 = vmul.f32 1.0, %v515
    %v517 = vtanh.pop %v497
    %v518 = vmul.f32 %v516, %v397
    %520 = vrot.lane.b32.xlu0 %v517, 64
    %v521 = vpop.permute.xlu0 %520
    %v523 = vmul.f32 %v516, %v521
    %525 = vrot.lane.b32.xlu0 %v523, 32
    %v526 = vpop.permute.xlu0 %525
    %v528 = vadd.f32 %v518, %v526
    %v529 = vtanh.pop %v528
    %531 = vrot.lane.b32.xlu0 %v529, 64
    %v532 = vpop.permute.xlu0 %531
    %v534 = vmul.f32 %v516, %v532
    %536 = vrot.lane.b32.xlu0 %v534, 32
    %v537 = vpop.permute.xlu0 %536
    %540 = vrot.lane.b32.xlu0 %v472, 64
    %v541 = vpop.permute.xlu0 %540
    %v543 = vsel %vm124, %v537, %v541
    %v545 = vsel %vm281, %v543, 0
    %547 = vmatpush.msra.mxu0 0.0
    %548 = vmatpush.msra.mxu0 0.0
    %549 = vmatpush.msra.mxu0 0.0
    %550 = vmatpush.msra.mxu0 0.0
    %551 = vmatpush.msra.mxu0 0.0
    %552 = vmatpush.msra.mxu0 0.0
    %553 = vmatpush.msra.mxu0 0.0
    %554 = vmatpush.msra.mxu0 0.0
    %555 = vmatpush.msra.mxu0 %v209
    %556 = vmatpush.msra.mxu0 %v208
    %557 = vmatpush.msra.mxu0 %v207
    %558 = vmatpush.msra.mxu0 %v206
    %559 = vmatpush.msra.mxu0 %v205
    %560 = vmatpush.msra.mxu0 %v204
    %561 = vmatpush.msra.mxu0 %v203
    %562 = vmatpush.msra.mxu0 %v202
    %563 = vmatmul.f32.gmra.mxu0 %v545
    %v564 = vpop.f32.mrf.mxu0
    %v565 = vadd.f32 %v279, %v564
    %566 = vdwg.mxu0
    %v567 = vxor.u32 %v565, 2147483648
    %v568 = vmul.f32 %v567, 1.442695
    %v569 = vpow.pop %v568
    %v570 = vadd.f32 %v569, 1.0
    %v571 = vrcp.pop %v570
    %v572 = vmul.f32 %v570, %v571
    %v573 = vsub.f32 1.0, %v572
    %v574 = vmul.f32 %v571, %v573
    %v575 = vadd.f32 %v571, %v574
    %vm576 = vweird.f32 %v570
    %vm577 = vweird.f32 %v571
    %vm578 = vmor %vm576, %vm577
    %v579 = vsel %vm578, %v571, %v575
    %v580 = vand.u32 2147483647, %v570
    %vm581 = vcmp.eq.f32.partialorder %v580, 8.507059e+37
    %v582 = vand.u32 %v570, 2147483648
    %v583 = vor.u32 1.1754944e-38, %v582
    %v584 = vsel %vm581, %v583, %v579
    %v585 = vmul.f32 1.0, %v584
    %v586 = vtanh.pop %v565
    %v587 = vmul.f32 %v585, %v466
    %589 = vrot.lane.b32.xlu0 %v586, 64
    %v590 = vpop.permute.xlu0 %589
    %v592 = vmul.f32 %v585, %v590
    %594 = vrot.lane.b32.xlu0 %v592, 32
    %v595 = vpop.permute.xlu0 %594
    %v597 = vadd.f32 %v587, %v595
    %v598 = vtanh.pop %v597
    %600 = vrot.lane.b32.xlu0 %v598, 64
    %v601 = vpop.permute.xlu0 %600
    %v603 = vmul.f32 %v585, %v601
    %s604 = scalar_lea.vmem [#allocation2], 24
    %v605 = vld [vmem:[%s604] sm:$0xff]
    %v606 = vsel %vm124, %v537, 0
    %608 = vmatpush.msra.mxu0 0.0
    %609 = vmatpush.msra.mxu0 0.0
    %610 = vmatpush.msra.mxu0 0.0
    %611 = vmatpush.msra.mxu0 0.0
    %612 = vmatpush.msra.mxu0 0.0
    %613 = vmatpush.msra.mxu0 0.0
    %614 = vmatpush.msra.mxu0 0.0
    %615 = vmatpush.msra.mxu0 0.0
    %616 = vmatpush.msra.mxu0 0.0
    %617 = vmatpush.msra.mxu0 0.0
    %618 = vmatpush.msra.mxu0 0.0
    %619 = vmatpush.msra.mxu0 0.0
    %620 = vmatpush.msra.mxu0 %v201
    %621 = vmatpush.msra.mxu0 %v200
    %622 = vmatpush.msra.mxu0 %v199
    %623 = vmatpush.msra.mxu0 %v198
    %624 = vmatmul.f32.gmra.mxu0 %v606
    %v625 = vpop.f32.mrf.mxu0
    %v626 = vadd.f32 0.0, %v625
    %627 = vdwg.mxu0
    %v628 = vadd.f32 %v605, %v626
    %v629 = vxor.u32 %v628, 2147483648
    %v630 = vmul.f32 %v629, 1.442695
    %v631 = vpow.pop %v630
    %v632 = vadd.f32 %v631, 1.0
    %v633 = vrcp.pop %v632
    %v634 = vmul.f32 %v632, %v633
    %v635 = vsub.f32 1.0, %v634
    %v636 = vmul.f32 %v633, %v635
    %v637 = vadd.f32 %v633, %v636
    %vm638 = vweird.f32 %v632
    %vm639 = vweird.f32 %v633
    %vm640 = vmor %vm638, %vm639
    %v641 = vsel %vm640, %v633, %v637
    %v642 = vand.u32 2147483647, %v632
    %vm643 = vcmp.eq.f32.partialorder %v642, 8.507059e+37
    %v644 = vand.u32 %v632, 2147483648
    %v645 = vor.u32 1.1754944e-38, %v644
    %v646 = vsel %vm643, %v645, %v641
    %v647 = vmul.f32 1.0, %v646
    %v648 = vtanh.pop %v628
    %v649 = vmul.f32 %v647, %v528
    %651 = vrot.lane.b32.xlu0 %v648, 64
    %v652 = vpop.permute.xlu0 %651
    %v654 = vmul.f32 %v647, %v652
    %656 = vrot.lane.b32.xlu0 %v654, 32
    %v657 = vpop.permute.xlu0 %656
    %v659 = vadd.f32 %v649, %v657
    %v660 = vtanh.pop %v659
    %662 = vrot.lane.b32.xlu0 %v660, 64
    %v663 = vpop.permute.xlu0 %662
    %v665 = vmul.f32 %v647, %v663
    %667 = vrot.lane.b32.xlu0 %v665, 32
    %v668 = vpop.permute.xlu0 %667
    %671 = vrot.lane.b32.xlu0 %v603, 64
    %v672 = vpop.permute.xlu0 %671
    %v674 = vsel %vm124, %v668, %v672
    %v676 = vsel %vm281, %v674, 0
    %678 = vmatpush.msra.mxu0 0.0
    %679 = vmatpush.msra.mxu0 0.0
    %680 = vmatpush.msra.mxu0 0.0
    %681 = vmatpush.msra.mxu0 0.0
    %682 = vmatpush.msra.mxu0 0.0
    %683 = vmatpush.msra.mxu0 0.0
    %684 = vmatpush.msra.mxu0 0.0
    %685 = vmatpush.msra.mxu0 0.0
    %686 = vmatpush.msra.mxu0 %v209
    %687 = vmatpush.msra.mxu0 %v208
    %688 = vmatpush.msra.mxu0 %v207
    %689 = vmatpush.msra.mxu0 %v206
    %690 = vmatpush.msra.mxu0 %v205
    %691 = vmatpush.msra.mxu0 %v204
    %692 = vmatpush.msra.mxu0 %v203
    %693 = vmatpush.msra.mxu0 %v202
    %694 = vmatmul.f32.gmra.mxu0 %v676
    %v695 = vpop.f32.mrf.mxu0
    %v696 = vadd.f32 %v279, %v695
    %697 = vdwg.mxu0
    %v698 = vxor.u32 %v696, 2147483648
    %v699 = vmul.f32 %v698, 1.442695
    %v700 = vpow.pop %v699
    %v701 = vadd.f32 %v700, 1.0
    %v702 = vrcp.pop %v701
    %v703 = vmul.f32 %v701, %v702
    %v704 = vsub.f32 1.0, %v703
    %v705 = vmul.f32 %v702, %v704
    %v706 = vadd.f32 %v702, %v705
    %vm707 = vweird.f32 %v701
    %vm708 = vweird.f32 %v702
    %vm709 = vmor %vm707, %vm708
    %v710 = vsel %vm709, %v702, %v706
    %v711 = vand.u32 2147483647, %v701
    %vm712 = vcmp.eq.f32.partialorder %v711, 8.507059e+37
    %v713 = vand.u32 %v701, 2147483648
    %v714 = vor.u32 1.1754944e-38, %v713
    %v715 = vsel %vm712, %v714, %v710
    %v716 = vmul.f32 1.0, %v715
    %v717 = vtanh.pop %v696
    %v718 = vmul.f32 %v716, %v597
    %720 = vrot.lane.b32.xlu0 %v717, 64
    %v721 = vpop.permute.xlu0 %720
    %v723 = vmul.f32 %v716, %v721
    %725 = vrot.lane.b32.xlu0 %v723, 32
    %v726 = vpop.permute.xlu0 %725
    %v728 = vadd.f32 %v718, %v726
    %v729 = vtanh.pop %v728
    %731 = vrot.lane.b32.xlu0 %v729, 64
    %v732 = vpop.permute.xlu0 %731
    %v734 = vmul.f32 %v716, %v732
    %s735 = scalar_lea.vmem [#allocation2], 32
    %v736 = vld [vmem:[%s735] sm:$0xff]
    %v737 = vsel %vm124, %v668, 0
    %739 = vmatpush.msra.mxu0 0.0
    %740 = vmatpush.msra.mxu0 0.0
    %741 = vmatpush.msra.mxu0 0.0
    %742 = vmatpush.msra.mxu0 0.0
    %743 = vmatpush.msra.mxu0 0.0
    %744 = vmatpush.msra.mxu0 0.0
    %745 = vmatpush.msra.mxu0 0.0
    %746 = vmatpush.msra.mxu0 0.0
    %747 = vmatpush.msra.mxu0 0.0
    %748 = vmatpush.msra.mxu0 0.0
    %749 = vmatpush.msra.mxu0 0.0
    %750 = vmatpush.msra.mxu0 0.0
    %751 = vmatpush.msra.mxu0 %v201
    %752 = vmatpush.msra.mxu0 %v200
    %753 = vmatpush.msra.mxu0 %v199
    %754 = vmatpush.msra.mxu0 %v198
    %755 = vmatmul.f32.gmra.mxu0 %v737
    %v756 = vpop.f32.mrf.mxu0
    %v757 = vadd.f32 0.0, %v756
    %758 = vdwg.mxu0
    %v759 = vadd.f32 %v736, %v757
    %v760 = vxor.u32 %v759, 2147483648
    %v761 = vmul.f32 %v760, 1.442695
    %v762 = vpow.pop %v761
    %v763 = vadd.f32 %v762, 1.0
    %v764 = vrcp.pop %v763
    %v765 = vmul.f32 %v763, %v764
    %v766 = vsub.f32 1.0, %v765
    %v767 = vmul.f32 %v764, %v766
    %v768 = vadd.f32 %v764, %v767
    %vm769 = vweird.f32 %v763
    %vm770 = vweird.f32 %v764
    %vm771 = vmor %vm769, %vm770
    %v772 = vsel %vm771, %v764, %v768
    %v773 = vand.u32 2147483647, %v763
    %vm774 = vcmp.eq.f32.partialorder %v773, 8.507059e+37
    %v775 = vand.u32 %v763, 2147483648
    %v776 = vor.u32 1.1754944e-38, %v775
    %v777 = vsel %vm774, %v776, %v772
    %v778 = vmul.f32 1.0, %v777
    %v779 = vtanh.pop %v759
    %v780 = vmul.f32 %v778, %v659
    %782 = vrot.lane.b32.xlu0 %v779, 64
    %v783 = vpop.permute.xlu0 %782
    %v785 = vmul.f32 %v778, %v783
    %787 = vrot.lane.b32.xlu0 %v785, 32
    %v788 = vpop.permute.xlu0 %787
    %v790 = vadd.f32 %v780, %v788
    %v791 = vtanh.pop %v790
    %793 = vrot.lane.b32.xlu0 %v791, 64
    %v794 = vpop.permute.xlu0 %793
    %v796 = vmul.f32 %v778, %v794
    %798 = vrot.lane.b32.xlu0 %v796, 32
    %v799 = vpop.permute.xlu0 %798
    %802 = vrot.lane.b32.xlu0 %v734, 64
    %v803 = vpop.permute.xlu0 %802
    %v805 = vsel %vm124, %v799, %v803
    %v807 = vsel %vm281, %v805, 0
    %809 = vmatpush.msra.mxu0 0.0
    %810 = vmatpush.msra.mxu0 0.0
    %811 = vmatpush.msra.mxu0 0.0
    %812 = vmatpush.msra.mxu0 0.0
    %813 = vmatpush.msra.mxu0 0.0
    %814 = vmatpush.msra.mxu0 0.0
    %815 = vmatpush.msra.mxu0 0.0
    %816 = vmatpush.msra.mxu0 0.0
    %817 = vmatpush.msra.mxu0 %v209
    %818 = vmatpush.msra.mxu0 %v208
    %819 = vmatpush.msra.mxu0 %v207
    %820 = vmatpush.msra.mxu0 %v206
    %821 = vmatpush.msra.mxu0 %v205
    %822 = vmatpush.msra.mxu0 %v204
    %823 = vmatpush.msra.mxu0 %v203
    %824 = vmatpush.msra.mxu0 %v202
    %825 = vmatmul.f32.gmra.mxu0 %v807
    %v826 = vpop.f32.mrf.mxu0
    %v827 = vadd.f32 %v279, %v826
    %828 = vdwg.mxu0
    %v829 = vxor.u32 %v827, 2147483648
    %v830 = vmul.f32 %v829, 1.442695
    %v831 = vpow.pop %v830
    %v832 = vadd.f32 %v831, 1.0
    %v833 = vrcp.pop %v832
    %v834 = vmul.f32 %v832, %v833
    %v835 = vsub.f32 1.0, %v834
    %v836 = vmul.f32 %v833, %v835
    %v837 = vadd.f32 %v833, %v836
    %vm838 = vweird.f32 %v832
    %vm839 = vweird.f32 %v833
    %vm840 = vmor %vm838, %vm839
    %v841 = vsel %vm840, %v833, %v837
    %v842 = vand.u32 2147483647, %v832
    %vm843 = vcmp.eq.f32.partialorder %v842, 8.507059e+37
    %v844 = vand.u32 %v832, 2147483648
    %v845 = vor.u32 1.1754944e-38, %v844
    %v846 = vsel %vm843, %v845, %v841
    %v847 = vmul.f32 1.0, %v846
    %v848 = vtanh.pop %v827
    %v849 = vmul.f32 %v847, %v728
    %851 = vrot.lane.b32.xlu0 %v848, 64
    %v852 = vpop.permute.xlu0 %851
    %v854 = vmul.f32 %v847, %v852
    %856 = vrot.lane.b32.xlu0 %v854, 32
    %v857 = vpop.permute.xlu0 %856
    %v859 = vadd.f32 %v849, %v857
    %v860 = vtanh.pop %v859
    %862 = vrot.lane.b32.xlu0 %v860, 64
    %v863 = vpop.permute.xlu0 %862
    %v865 = vmul.f32 %v847, %v863
    %s866 = scalar_lea.vmem [#allocation2], 40
    %v867 = vld [vmem:[%s866] sm:$0xff]
    %v868 = vsel %vm124, %v799, 0
    %870 = vmatpush.msra.mxu0 0.0
    %871 = vmatpush.msra.mxu0 0.0
    %872 = vmatpush.msra.mxu0 0.0
    %873 = vmatpush.msra.mxu0 0.0
    %874 = vmatpush.msra.mxu0 0.0
    %875 = vmatpush.msra.mxu0 0.0
    %876 = vmatpush.msra.mxu0 0.0
    %877 = vmatpush.msra.mxu0 0.0
    %878 = vmatpush.msra.mxu0 0.0
    %879 = vmatpush.msra.mxu0 0.0
    %880 = vmatpush.msra.mxu0 0.0
    %881 = vmatpush.msra.mxu0 0.0
    %882 = vmatpush.msra.mxu0 %v201
    %883 = vmatpush.msra.mxu0 %v200
    %884 = vmatpush.msra.mxu0 %v199
    %885 = vmatpush.msra.mxu0 %v198
    %886 = vmatmul.f32.gmra.mxu0 %v868
    %v887 = vpop.f32.mrf.mxu0
    %v888 = vadd.f32 0.0, %v887
    %889 = vdwg.mxu0
    %v890 = vadd.f32 %v867, %v888
    %v891 = vxor.u32 %v890, 2147483648
    %v892 = vmul.f32 %v891, 1.442695
    %v893 = vpow.pop %v892
    %v894 = vadd.f32 %v893, 1.0
    %v895 = vrcp.pop %v894
    %v896 = vmul.f32 %v894, %v895
    %v897 = vsub.f32 1.0, %v896
    %v898 = vmul.f32 %v895, %v897
    %v899 = vadd.f32 %v895, %v898
    %vm900 = vweird.f32 %v894
    %vm901 = vweird.f32 %v895
    %vm902 = vmor %vm900, %vm901
    %v903 = vsel %vm902, %v895, %v899
    %v904 = vand.u32 2147483647, %v894
    %vm905 = vcmp.eq.f32.partialorder %v904, 8.507059e+37
    %v906 = vand.u32 %v894, 2147483648
    %v907 = vor.u32 1.1754944e-38, %v906
    %v908 = vsel %vm905, %v907, %v903
    %v909 = vmul.f32 1.0, %v908
    %v910 = vtanh.pop %v890
    %v911 = vmul.f32 %v909, %v790
    %913 = vrot.lane.b32.xlu0 %v910, 64
    %v914 = vpop.permute.xlu0 %913
    %v916 = vmul.f32 %v909, %v914
    %918 = vrot.lane.b32.xlu0 %v916, 32
    %v919 = vpop.permute.xlu0 %918
    %v921 = vadd.f32 %v911, %v919
    %v922 = vtanh.pop %v921
    %924 = vrot.lane.b32.xlu0 %v922, 64
    %v925 = vpop.permute.xlu0 %924
    %v927 = vmul.f32 %v909, %v925
    %929 = vrot.lane.b32.xlu0 %v927, 32
    %v930 = vpop.permute.xlu0 %929
    %933 = vrot.lane.b32.xlu0 %v865, 64
    %v934 = vpop.permute.xlu0 %933
    %v936 = vsel %vm124, %v930, %v934
    %v938 = vsel %vm281, %v936, 0
    %940 = vmatpush.msra.mxu0 0.0
    %941 = vmatpush.msra.mxu0 0.0
    %942 = vmatpush.msra.mxu0 0.0
    %943 = vmatpush.msra.mxu0 0.0
    %944 = vmatpush.msra.mxu0 0.0
    %945 = vmatpush.msra.mxu0 0.0
    %946 = vmatpush.msra.mxu0 0.0
    %947 = vmatpush.msra.mxu0 0.0
    %948 = vmatpush.msra.mxu0 %v209
    %949 = vmatpush.msra.mxu0 %v208
    %950 = vmatpush.msra.mxu0 %v207
    %951 = vmatpush.msra.mxu0 %v206
    %952 = vmatpush.msra.mxu0 %v205
    %953 = vmatpush.msra.mxu0 %v204
    %954 = vmatpush.msra.mxu0 %v203
    %955 = vmatpush.msra.mxu0 %v202
    %956 = vmatmul.f32.gmra.mxu0 %v938
    %v957 = vpop.f32.mrf.mxu0
    %v958 = vadd.f32 %v279, %v957
    %959 = vdwg.mxu0
    %v960 = vxor.u32 %v958, 2147483648
    %v961 = vmul.f32 %v960, 1.442695
    %v962 = vpow.pop %v961
    %v963 = vadd.f32 %v962, 1.0
    %v964 = vrcp.pop %v963
    %v965 = vmul.f32 %v963, %v964
    %v966 = vsub.f32 1.0, %v965
    %v967 = vmul.f32 %v964, %v966
    %v968 = vadd.f32 %v964, %v967
    %vm969 = vweird.f32 %v963
    %vm970 = vweird.f32 %v964
    %vm971 = vmor %vm969, %vm970
    %v972 = vsel %vm971, %v964, %v968
    %v973 = vand.u32 2147483647, %v963
    %vm974 = vcmp.eq.f32.partialorder %v973, 8.507059e+37
    %v975 = vand.u32 %v963, 2147483648
    %v976 = vor.u32 1.1754944e-38, %v975
    %v977 = vsel %vm974, %v976, %v972
    %v978 = vmul.f32 1.0, %v977
    %v979 = vtanh.pop %v958
    %v980 = vmul.f32 %v978, %v859
    %982 = vrot.lane.b32.xlu0 %v979, 64
    %v983 = vpop.permute.xlu0 %982
    %v985 = vmul.f32 %v978, %v983
    %987 = vrot.lane.b32.xlu0 %v985, 32
    %v988 = vpop.permute.xlu0 %987
    %v990 = vadd.f32 %v980, %v988
    %v991 = vtanh.pop %v990
    %993 = vrot.lane.b32.xlu0 %v991, 64
    %v994 = vpop.permute.xlu0 %993
    %v996 = vmul.f32 %v978, %v994
    %s997 = scalar_lea.vmem [#allocation2], 48
    %v998 = vld [vmem:[%s997] sm:$0xff]
    %v999 = vsel %vm124, %v930, 0
    %1001 = vmatpush.msra.mxu0 0.0
    %1002 = vmatpush.msra.mxu0 0.0
    %1003 = vmatpush.msra.mxu0 0.0
    %1004 = vmatpush.msra.mxu0 0.0
    %1005 = vmatpush.msra.mxu0 0.0
    %1006 = vmatpush.msra.mxu0 0.0
    %1007 = vmatpush.msra.mxu0 0.0
    %1008 = vmatpush.msra.mxu0 0.0
    %1009 = vmatpush.msra.mxu0 0.0
    %1010 = vmatpush.msra.mxu0 0.0
    %1011 = vmatpush.msra.mxu0 0.0
    %1012 = vmatpush.msra.mxu0 0.0
    %1013 = vmatpush.msra.mxu0 %v201
    %1014 = vmatpush.msra.mxu0 %v200
    %1015 = vmatpush.msra.mxu0 %v199
    %1016 = vmatpush.msra.mxu0 %v198
    %1017 = vmatmul.f32.gmra.mxu0 %v999
    %v1018 = vpop.f32.mrf.mxu0
    %v1019 = vadd.f32 0.0, %v1018
    %1020 = vdwg.mxu0
    %v1021 = vadd.f32 %v998, %v1019
    %v1022 = vxor.u32 %v1021, 2147483648
    %v1023 = vmul.f32 %v1022, 1.442695
    %v1024 = vpow.pop %v1023
    %v1025 = vadd.f32 %v1024, 1.0
    %v1026 = vrcp.pop %v1025
    %v1027 = vmul.f32 %v1025, %v1026
    %v1028 = vsub.f32 1.0, %v1027
    %v1029 = vmul.f32 %v1026, %v1028
    %v1030 = vadd.f32 %v1026, %v1029
    %vm1031 = vweird.f32 %v1025
    %vm1032 = vweird.f32 %v1026
    %vm1033 = vmor %vm1031, %vm1032
    %v1034 = vsel %vm1033, %v1026, %v1030
    %v1035 = vand.u32 2147483647, %v1025
    %vm1036 = vcmp.eq.f32.partialorder %v1035, 8.507059e+37
    %v1037 = vand.u32 %v1025, 2147483648
    %v1038 = vor.u32 1.1754944e-38, %v1037
    %v1039 = vsel %vm1036, %v1038, %v1034
    %v1040 = vmul.f32 1.0, %v1039
    %v1041 = vtanh.pop %v1021
    %v1042 = vmul.f32 %v1040, %v921
    %1044 = vrot.lane.b32.xlu0 %v1041, 64
    %v1045 = vpop.permute.xlu0 %1044
    %v1047 = vmul.f32 %v1040, %v1045
    %1049 = vrot.lane.b32.xlu0 %v1047, 32
    %v1050 = vpop.permute.xlu0 %1049
    %v1052 = vadd.f32 %v1042, %v1050
    %v1053 = vtanh.pop %v1052
    %1055 = vrot.lane.b32.xlu0 %v1053, 64
    %v1056 = vpop.permute.xlu0 %1055
    %v1058 = vmul.f32 %v1040, %v1056
    %1060 = vrot.lane.b32.xlu0 %v1058, 32
    %v1061 = vpop.permute.xlu0 %1060
    %1064 = vrot.lane.b32.xlu0 %v996, 64
    %v1065 = vpop.permute.xlu0 %1064
    %v1067 = vsel %vm124, %v1061, %v1065
    %v1069 = vsel %vm281, %v1067, 0
    %1071 = vmatpush.msra.mxu0 0.0
    %1072 = vmatpush.msra.mxu0 0.0
    %1073 = vmatpush.msra.mxu0 0.0
    %1074 = vmatpush.msra.mxu0 0.0
    %1075 = vmatpush.msra.mxu0 0.0
    %1076 = vmatpush.msra.mxu0 0.0
    %1077 = vmatpush.msra.mxu0 0.0
    %1078 = vmatpush.msra.mxu0 0.0
    %1079 = vmatpush.msra.mxu0 %v209
    %1080 = vmatpush.msra.mxu0 %v208
    %1081 = vmatpush.msra.mxu0 %v207
    %1082 = vmatpush.msra.mxu0 %v206
    %1083 = vmatpush.msra.mxu0 %v205
    %1084 = vmatpush.msra.mxu0 %v204
    %1085 = vmatpush.msra.mxu0 %v203
    %1086 = vmatpush.msra.mxu0 %v202
    %1087 = vmatmul.f32.gmra.mxu0 %v1069
    %v1088 = vpop.f32.mrf.mxu0
    %v1089 = vadd.f32 %v279, %v1088
    %1090 = vdwg.mxu0
    %v1091 = vxor.u32 %v1089, 2147483648
    %v1092 = vmul.f32 %v1091, 1.442695
    %v1093 = vpow.pop %v1092
    %v1094 = vadd.f32 %v1093, 1.0
    %v1095 = vrcp.pop %v1094
    %v1096 = vmul.f32 %v1094, %v1095
    %v1097 = vsub.f32 1.0, %v1096
    %v1098 = vmul.f32 %v1095, %v1097
    %v1099 = vadd.f32 %v1095, %v1098
    %vm1100 = vweird.f32 %v1094
    %vm1101 = vweird.f32 %v1095
    %vm1102 = vmor %vm1100, %vm1101
    %v1103 = vsel %vm1102, %v1095, %v1099
    %v1104 = vand.u32 2147483647, %v1094
    %vm1105 = vcmp.eq.f32.partialorder %v1104, 8.507059e+37
    %v1106 = vand.u32 %v1094, 2147483648
    %v1107 = vor.u32 1.1754944e-38, %v1106
    %v1108 = vsel %vm1105, %v1107, %v1103
    %v1109 = vmul.f32 1.0, %v1108
    %v1110 = vtanh.pop %v1089
    %v1111 = vmul.f32 %v1109, %v990
    %1113 = vrot.lane.b32.xlu0 %v1110, 64
    %v1114 = vpop.permute.xlu0 %1113
    %v1116 = vmul.f32 %v1109, %v1114
    %1118 = vrot.lane.b32.xlu0 %v1116, 32
    %v1119 = vpop.permute.xlu0 %1118
    %v1121 = vadd.f32 %v1111, %v1119
    %v1122 = vtanh.pop %v1121
    %1124 = vrot.lane.b32.xlu0 %v1122, 64
    %v1125 = vpop.permute.xlu0 %1124
    %v1127 = vmul.f32 %v1109, %v1125
    %s1128 = scalar_lea.vmem [#allocation2], 56
    %v1129 = vld [vmem:[%s1128] sm:$0xff]
    %v1130 = vsel %vm124, %v1061, 0
    %1132 = vmatpush.msra.mxu0 0.0
    %1133 = vmatpush.msra.mxu0 0.0
    %1134 = vmatpush.msra.mxu0 0.0
    %1135 = vmatpush.msra.mxu0 0.0
    %1136 = vmatpush.msra.mxu0 0.0
    %1137 = vmatpush.msra.mxu0 0.0
    %1138 = vmatpush.msra.mxu0 0.0
    %1139 = vmatpush.msra.mxu0 0.0
    %1140 = vmatpush.msra.mxu0 0.0
    %1141 = vmatpush.msra.mxu0 0.0
    %1142 = vmatpush.msra.mxu0 0.0
    %1143 = vmatpush.msra.mxu0 0.0
    %1144 = vmatpush.msra.mxu0 %v201
    %1145 = vmatpush.msra.mxu0 %v200
    %1146 = vmatpush.msra.mxu0 %v199
    %1147 = vmatpush.msra.mxu0 %v198
    %1148 = vmatmul.f32.gmra.mxu0 %v1130
    %v1149 = vpop.f32.mrf.mxu0
    %v1150 = vadd.f32 0.0, %v1149
    %1151 = vdwg.mxu0
    %v1152 = vadd.f32 %v1129, %v1150
    %v1153 = vxor.u32 %v1152, 2147483648
    %v1154 = vmul.f32 %v1153, 1.442695
    %v1155 = vpow.pop %v1154
    %v1156 = vadd.f32 %v1155, 1.0
    %v1157 = vrcp.pop %v1156
    %v1158 = vmul.f32 %v1156, %v1157
    %v1159 = vsub.f32 1.0, %v1158
    %v1160 = vmul.f32 %v1157, %v1159
    %v1161 = vadd.f32 %v1157, %v1160
    %vm1162 = vweird.f32 %v1156
    %vm1163 = vweird.f32 %v1157
    %vm1164 = vmor %vm1162, %vm1163
    %v1165 = vsel %vm1164, %v1157, %v1161
    %v1166 = vand.u32 2147483647, %v1156
    %vm1167 = vcmp.eq.f32.partialorder %v1166, 8.507059e+37
    %v1168 = vand.u32 %v1156, 2147483648
    %v1169 = vor.u32 1.1754944e-38, %v1168
    %v1170 = vsel %vm1167, %v1169, %v1165
    %v1171 = vmul.f32 1.0, %v1170
    %v1172 = vtanh.pop %v1152
    %v1173 = vmul.f32 %v1171, %v1052
    %1175 = vrot.lane.b32.xlu0 %v1172, 64
    %v1176 = vpop.permute.xlu0 %1175
    %v1178 = vmul.f32 %v1171, %v1176
    %1180 = vrot.lane.b32.xlu0 %v1178, 32
    %v1181 = vpop.permute.xlu0 %1180
    %v1183 = vadd.f32 %v1173, %v1181
    %v1184 = vtanh.pop %v1183
    %1186 = vrot.lane.b32.xlu0 %v1184, 64
    %v1187 = vpop.permute.xlu0 %1186
    %v1189 = vmul.f32 %v1171, %v1187
    %1191 = vrot.lane.b32.xlu0 %v1189, 32
    %v1192 = vpop.permute.xlu0 %1191
    %1195 = vrot.lane.b32.xlu0 %v1127, 64
    %v1196 = vpop.permute.xlu0 %1195
    %v1198 = vsel %vm124, %v1192, %v1196
    %v1200 = vsel %vm281, %v1198, 0
    %1202 = vmatpush.msra.mxu0 0.0
    %1203 = vmatpush.msra.mxu0 0.0
    %1204 = vmatpush.msra.mxu0 0.0
    %1205 = vmatpush.msra.mxu0 0.0
    %1206 = vmatpush.msra.mxu0 0.0
    %1207 = vmatpush.msra.mxu0 0.0
    %1208 = vmatpush.msra.mxu0 0.0
    %1209 = vmatpush.msra.mxu0 0.0
    %1210 = vmatpush.msra.mxu0 %v209
    %1211 = vmatpush.msra.mxu0 %v208
    %1212 = vmatpush.msra.mxu0 %v207
    %1213 = vmatpush.msra.mxu0 %v206
    %1214 = vmatpush.msra.mxu0 %v205
    %1215 = vmatpush.msra.mxu0 %v204
    %1216 = vmatpush.msra.mxu0 %v203
    %1217 = vmatpush.msra.mxu0 %v202
    %1218 = vmatmul.f32.gmra.mxu0 %v1200
    %v1219 = vpop.f32.mrf.mxu0
    %v1220 = vadd.f32 %v279, %v1219
    %1221 = vdwg.mxu0
    %v1222 = vxor.u32 %v1220, 2147483648
    %v1223 = vmul.f32 %v1222, 1.442695
    %v1224 = vpow.pop %v1223
    %v1225 = vadd.f32 %v1224, 1.0
    %v1226 = vrcp.pop %v1225
    %v1227 = vmul.f32 %v1225, %v1226
    %v1228 = vsub.f32 1.0, %v1227
    %v1229 = vmul.f32 %v1226, %v1228
    %v1230 = vadd.f32 %v1226, %v1229
    %vm1231 = vweird.f32 %v1225
    %vm1232 = vweird.f32 %v1226
    %vm1233 = vmor %vm1231, %vm1232
    %v1234 = vsel %vm1233, %v1226, %v1230
    %v1235 = vand.u32 2147483647, %v1225
    %vm1236 = vcmp.eq.f32.partialorder %v1235, 8.507059e+37
    %v1237 = vand.u32 %v1225, 2147483648
    %v1238 = vor.u32 1.1754944e-38, %v1237
    %v1239 = vsel %vm1236, %v1238, %v1234
    %v1240 = vmul.f32 1.0, %v1239
    %v1241 = vtanh.pop %v1220
    %v1242 = vmul.f32 %v1240, %v1121
    %1244 = vrot.lane.b32.xlu0 %v1241, 64
    %v1245 = vpop.permute.xlu0 %1244
    %v1247 = vmul.f32 %v1240, %v1245
    %1249 = vrot.lane.b32.xlu0 %v1247, 32
    %v1250 = vpop.permute.xlu0 %1249
    %v1252 = vadd.f32 %v1242, %v1250
    %v1253 = vtanh.pop %v1252
    %1255 = vrot.lane.b32.xlu0 %v1253, 64
    %v1256 = vpop.permute.xlu0 %1255
    %v1258 = vmul.f32 %v1240, %v1256
    %v1259 = vld [vmem:[#allocation11] sm:$0xff]
    %v1260 = vld [vmem:[#allocation11 + $0x8] sm:$0xff]
    %v1261 = vld [vmem:[#allocation11 + $0x10] sm:$0xff]
    %v1262 = vld [vmem:[#allocation11 + $0x18] sm:$0xff]
    %v1263 = vld [vmem:[%s7] sm:$0x1]
    %v1265 = vperm.slane %v1263, 0
    %1268 = vrot.lane.b32.xlu0 %v1258, 32
    %v1269 = vpop.permute.xlu0 %1268
    %v1270 = vsel %vm124, %v1269, 0
    %1272 = vmatpush.msra.mxu0 0.0
    %1273 = vmatpush.msra.mxu0 0.0
    %1274 = vmatpush.msra.mxu0 0.0
    %1275 = vmatpush.msra.mxu0 0.0
    %1276 = vmatpush.msra.mxu0 0.0
    %1277 = vmatpush.msra.mxu0 0.0
    %1278 = vmatpush.msra.mxu0 0.0
    %1279 = vmatpush.msra.mxu0 0.0
    %1280 = vmatpush.msra.mxu0 0.0
    %1281 = vmatpush.msra.mxu0 0.0
    %1282 = vmatpush.msra.mxu0 0.0
    %1283 = vmatpush.msra.mxu0 0.0
    %1284 = vmatpush.msra.mxu0 %v1262
    %1285 = vmatpush.msra.mxu0 %v1261
    %1286 = vmatpush.msra.mxu0 %v1260
    %1287 = vmatpush.msra.mxu0 %v1259
    %1288 = vmatmul.f32.gmra.mxu0 %v1270
    %v1289 = vpop.f32.mrf.mxu0
    %v1290 = vadd.f32 %v1265, %v1289
    %1291 = vdwg.mxu0
    %1292 = vst [vmem:[#allocation12] sm:$0xff] %v1290
    // Predicated region
    $region54: #{tpu_custom_call.1} parent=1 // pred_check
      _
    $region55: #{tpu_custom_call.1} parent=1 // pred_check_branch
      %1294 = sbr.rel (0) target = $region57
    $region56: #{tpu_custom_call.1} parent=1 // pred_region
      %1296 = vsyncadd [#allocation5], 0
      %s1298 = sshll.u32 [#allocation12], 4
      %s1299 = int_to_ptr.vmem [resolvable:$true] %s1298
      %s1300 = sshll.u32 %s8, 4
      %s1301 = int_to_ptr.hbm [resolvable:$true] %s1300
      %1303 = dma.vmem_to_hbm [thread:$0]  %s1299, 128, %s1301, [#allocation5]
    $region57: #{tpu_custom_call.1} parent=1 // pred_fallthru
      _
    // Predicated region
    $region58: #{tpu_custom_call.1} parent=1 // pred_check
      _
    $region59: #{tpu_custom_call.1} parent=1 // pred_check_branch
      %1305 = sbr.rel (0) target = $region61
    $region60: #{tpu_custom_call.1} parent=1 // pred_region
      %1307 = dma.done [#allocation5], 128
    $region61: #{tpu_custom_call.1} parent=1 // pred_fallthru
      _
    %1308 = vsyncpa [#allocation4], 1
    %1309 = vsyncpa [#allocation7], 1
    %1310 = vsyncpa [#allocation10], 1
    %1311 = vsyncpa [#allocation5], 1

</llo_original>
